<compile_context>
chip_gen: v6e
topology: v6e:2x2x1
jax: 0.10.0
libtpu: 0.0.40
codegen_flags: <defaults>
</compile_context>

<pallas_src>
import numpy as np
import jax
import jax.numpy as jnp
from jax import lax
from jax.experimental import pallas as pl
from jax.experimental.pallas import tpu as pltpu

# ---------------- config (mirrors Transconfig) ----------------
D_MODEL = 7
D_FF = 2048
CYCLE_NUM = 5
LN_EPS = 1e-5          # torch.nn.LayerNorm default


# ---------------- fused FFN + residual + LayerNorm kernel ----------------
def ffn_kernel(x_ref, w1_ref, w2_ref, o_ref):
    # x_ref: (BLOCK_M, d_model) rows; w1: (d_model, d_ff); w2: (d_ff, d_model)
    x = x_ref[...].astype(jnp.float32)

    h = jnp.dot(x, w1_ref[...], preferred_element_type=jnp.float32)       # (BM, d_ff)
    h = jnp.maximum(h, 0.0)                                                # ReLU
    y = jnp.dot(h, w2_ref[...], preferred_element_type=jnp.float32)       # (BM, d)

    r = y + x                                                              # residual
    mean = jnp.mean(r, axis=-1, keepdims=True)
    c = r - mean
    var = jnp.mean(c * c, axis=-1, keepdims=True)
    o_ref[...] = (c * lax.rsqrt(var + LN_EPS)).astype(o_ref.dtype)         # LN (w=1, b=0)


def _round_up(x, m):
    return (x + m - 1) // m * m


def _pick_block_m(m, max_block=256):
    """Rows per grid step: multiple of 8, big enough to fill the MXU M dim,
    and >= 2 grid steps when m allows it (v7x has 2 TensorCores)."""
    if m <= 16:
        return _round_up(m, 8)
    return min(max_block, _round_up(pl.cdiv(m, 2), 8))


def poswise_ffn(x, w1, w2, *, max_block_m=256):
    """x: (..., d_model) -> LayerNorm(ReLU(x @ w1) @ w2 + x), same shape."""
    d = x.shape[-1]
    lead = x.shape[:-1]
    m = int(np.prod(lead)) if lead else 1

    xf = x.reshape(m, d).astype(jnp.float32)
    bm = _pick_block_m(m, max_block_m)
    m_pad = _round_up(m, bm)
    if m_pad != m:
        # zero rows are harmless (LayerNorm of zeros -> zeros) and sliced off below
        xf = jnp.pad(xf, ((0, m_pad - m), (0, 0)))

    out = pl.pallas_call(
        ffn_kernel,
        grid=(m_pad // bm,),
        in_specs=[
            pl.BlockSpec((bm, d), lambda i: (i, 0)),        # activation rows, tiled
            pl.BlockSpec(w1.shape, lambda i: (0, 0)),        # W1 resident in VMEM
            pl.BlockSpec(w2.shape, lambda i: (0, 0)),        # W2 resident in VMEM
        ],
        out_specs=pl.BlockSpec((bm, d), lambda i: (i, 0)),
        out_shape=jax.ShapeDtypeStruct((m_pad, d), jnp.float32),
        compiler_params=pltpu.CompilerParams(
            dimension_semantics=("parallel",)),
    )(xf, w1, w2)

    return out[:m].reshape(*lead, d)


# ---------------- reference (pure JAX) ----------------
def poswise_ffn_ref(x, w1, w2):
    h = jnp.maximum(jnp.dot(x, w1, precision=lax.Precision.HIGHEST), 0.0)
    y = jnp.dot(h, w2, precision=lax.Precision.HIGHEST) + x
    mu = y.mean(-1, keepdims=True)
    var = ((y - mu) ** 2).mean(-1, keepdims=True)
    return (y - mu) / jnp.sqrt(var + LN_EPS)


if __name__ == "__main__":
    # Small demo shapes consistent with the module's use inside the transformer:
    # (batch, cycle_num, d_model); the full model uses batch=256, seq=5, d_model=7.
    B, S = 16, CYCLE_NUM
    key = jax.random.PRNGKey(0)
    kx, k1, k2 = jax.random.split(key, 3)

    x = jax.random.normal(kx, (B, S, D_MODEL), dtype=jnp.float32)
    # weights stored as (in, out) == torch weight.T, so the kernel does x @ W
    w1 = (0.1 * jax.random.normal(k1, (D_MODEL, D_FF))).astype(jnp.float32)
    w2 = (0.1 * jax.random.normal(k2, (D_FF, D_MODEL))).astype(jnp.float32)

    out = poswise_ffn(x, w1, w2)
    out = jax.block_until_ready(out)

    ref = poswise_ffn_ref(x, w1, w2)
    assert out.shape == (B, S, D_MODEL)
    assert bool(jnp.allclose(out, ref, rtol=1e-2, atol=1e-2)), "mismatch vs reference"
    print("KERNEL_OK")
</pallas_src>

<mosaic_0001>
module attributes {stable_mosaic.version = 11 : i64} {
  func.func @ffn_kernel(%arg0: i32, %arg1: memref<40x7xf32, #tpu.memory_space<vmem>>, %arg2: memref<7x2048xf32, #tpu.memory_space<vmem>>, %arg3: memref<2048x7xf32, #tpu.memory_space<vmem>>, %arg4: memref<40x7xf32, #tpu.memory_space<vmem>>) attributes {dimension_semantics = [#tpu.dimension_semantics<parallel>], iteration_bounds = array<i64: 2>, scalar_prefetch = 0 : i64, scratch_operands = 0 : i64, tpu.core_type = #tpu.core_type<tc>, window_params = [{transform_indices = @transform_0, window_bounds = array<i64: 40, 7>}, {pipeline_mode = #tpu.pipeline_mode<synchronous>, transform_indices = @transform_1, window_bounds = array<i64: 7, 2048>}, {pipeline_mode = #tpu.pipeline_mode<synchronous>, transform_indices = @transform_2, window_bounds = array<i64: 2048, 7>}, {transform_indices = @transform_3, window_bounds = array<i64: 40, 7>}]} {
    %c0 = arith.constant 0 : index
    %c0_0 = arith.constant 0 : index
    %0 = vector.load %arg1[%c0, %c0_0] : memref<40x7xf32, #tpu.memory_space<vmem>>, vector<40x7xf32>
    %c0_1 = arith.constant 0 : index
    %c0_2 = arith.constant 0 : index
    %1 = vector.load %arg2[%c0_1, %c0_2] : memref<7x2048xf32, #tpu.memory_space<vmem>>, vector<7x2048xf32>
    %cst = arith.constant dense<0.000000e+00> : vector<40x2048xf32>
    %2 = tpu.matmul %0, %1, %cst {dimension_numbers = #tpu.dot_dimension_numbers<[1], [0], [0], [1], [0, 0, 1, 1], [], []>} : vector<40x7xf32>, vector<7x2048xf32>, vector<40x2048xf32> -> vector<40x2048xf32>
    %cst_3 = arith.constant 0.000000e+00 : f32
    %3 = vector.broadcast %cst_3 : f32 to vector<40x2048xf32>
    %4 = arith.maximumf %2, %3 : vector<40x2048xf32>
    %c0_4 = arith.constant 0 : index
    %c0_5 = arith.constant 0 : index
    %5 = vector.load %arg3[%c0_4, %c0_5] : memref<2048x7xf32, #tpu.memory_space<vmem>>, vector<2048x7xf32>
    %cst_6 = arith.constant dense<0.000000e+00> : vector<40x7xf32>
    %6 = tpu.matmul %4, %5, %cst_6 {dimension_numbers = #tpu.dot_dimension_numbers<[1], [0], [0], [1], [0, 0, 1, 1], [], []>} : vector<40x2048xf32>, vector<2048x7xf32>, vector<40x7xf32> -> vector<40x7xf32>
    %7 = arith.addf %6, %0 : vector<40x7xf32>
    %cst_7 = arith.constant dense<0.000000e+00> : vector<40xf32>
    %8 = vector.multi_reduction <add>, %7, %cst_7 [1] : vector<40x7xf32> to vector<40xf32>
    %9 = vector.shape_cast %8 : vector<40xf32> to vector<40x1xf32>
    %cst_8 = arith.constant 7.000000e+00 : f32
    %10 = vector.broadcast %cst_8 : f32 to vector<40x1xf32>
    %11 = arith.divf %9, %10 : vector<40x1xf32>
    %12 = vector.broadcast %11 : vector<40x1xf32> to vector<40x7xf32>
    %13 = arith.subf %7, %12 : vector<40x7xf32>
    %14 = arith.mulf %13, %13 : vector<40x7xf32>
    %cst_9 = arith.constant dense<0.000000e+00> : vector<40xf32>
    %15 = vector.multi_reduction <add>, %14, %cst_9 [1] : vector<40x7xf32> to vector<40xf32>
    %16 = vector.shape_cast %15 : vector<40xf32> to vector<40x1xf32>
    %cst_10 = arith.constant 7.000000e+00 : f32
    %17 = vector.broadcast %cst_10 : f32 to vector<40x1xf32>
    %18 = arith.divf %16, %17 : vector<40x1xf32>
    %cst_11 = arith.constant 9.99999974E-6 : f32
    %19 = vector.broadcast %cst_11 : f32 to vector<40x1xf32>
    %20 = arith.addf %18, %19 : vector<40x1xf32>
    %21 = math.rsqrt %20 : vector<40x1xf32>
    %22 = vector.broadcast %21 : vector<40x1xf32> to vector<40x7xf32>
    %23 = arith.mulf %13, %22 : vector<40x7xf32>
    %c0_12 = arith.constant 0 : index
    %c0_13 = arith.constant 0 : index
    %24 = vector.load %arg4[%c0_12, %c0_13] : memref<40x7xf32, #tpu.memory_space<vmem>>, vector<40x7xf32>
    tpu.vector_store %arg4[%c0_12, %c0_13], %23 {strides = array<i32>} : memref<40x7xf32, #tpu.memory_space<vmem>>, vector<40x7xf32>,
    return
  }
  func.func @transform_0(%arg0: i32) -> (i32, i32) {
    %c0_i32 = arith.constant 0 : i32
    %c0_i32_0 = arith.constant 0 : i32
    return %arg0, %c0_i32 : i32, i32
  }
  func.func @transform_1(%arg0: i32) -> (i32, i32) {
    %c0_i32 = arith.constant 0 : i32
    %c0_i32_0 = arith.constant 0 : i32
    %c0_i32_1 = arith.constant 0 : i32
    return %c0_i32, %c0_i32_0 : i32, i32
  }
  func.func @transform_2(%arg0: i32) -> (i32, i32) {
    %c0_i32 = arith.constant 0 : i32
    %c0_i32_0 = arith.constant 0 : i32
    %c0_i32_1 = arith.constant 0 : i32
    return %c0_i32, %c0_i32_0 : i32, i32
  }
  func.func @transform_3(%arg0: i32) -> (i32, i32) {
    %c0_i32 = arith.constant 0 : i32
    %c0_i32_0 = arith.constant 0 : i32
    return %arg0, %c0_i32 : i32, i32
  }
}

</mosaic_0001>

<llo_original>
// kernel: tpu_custom_call.1
$region0: #{tpu_custom_call.1}
  #allocation0 [shape = 'u32[]', space=smem, size = 0x4, offset = 0x4, fixed_abs, tag = 'smem constant byte address 0x4 - core index']
  #allocation1 [shape = 'u32[144,128]{1,0:T(1,128)}', space=vmem, size = 0x12000, scoped, tag = 'internal scratch']
  %s0 = inlined_call_operand.vmem [shape: f32[80,7], index: 0, kind: input, shape index: {}]
  %s1 = inlined_call_operand.vmem [shape: f32[7,2048], index: 1, kind: input, shape index: {}]
  %s2 = inlined_call_operand.vmem [shape: f32[2048,7], index: 2, kind: input, shape index: {}]
  %s3 = inlined_call_operand.vmem [shape: f32[80,7], index: 3, kind: output, shape index: {}]
  %s4 = sld [smem:[#allocation0]]
  $region45: #{tpu_custom_call.1} parent=0
    _
  %s6 = ssub.s32 1, %s4
  %s7 = scalar_select 0, %s6, %s4
  loop: start=0, step=1, limit=4
  $region2: #{tpu_custom_call.1} parent=0 // loop_pre_header
    _
  $region3: #{tpu_custom_call.1} parent=0 // loop_header
    %s9 = sphi 0, %s13
    %p10 = scmp.ge.s32.totalorder %s9, 4
    %s19 = sphi 0, %s21
    %s22 = sphi 0, %s19
    %s23 = sphi 0, %s22
    %s39 = sphi 0, %s23
    %s43 = sphi 0, %s43
    %s45 = sphi 0, %s43
    %s46 = sphi 0, %s45
    %s60 = sphi 0, %s46
    %s64 = sphi 0, %s64
    %s66 = sphi 0, %s64
    %s67 = sphi 0, %s66
    %s81 = sphi 0, %s67
    %s87 = sphi 0, %s89
    %s90 = sphi 0, %s87
    %s91 = sphi 0, %s90
    %s107 = sphi 0, %s91
  $region4: #{tpu_custom_call.1} parent=0 // loop_header_branch
    %12 = sbr.rel (%p10) target = $region8
  $region5: #{tpu_custom_call.1} parent=0 // loop_body
    %s14 = ssub.s32 %s9, 1
    %s15 = ssub.s32 %s9, 2
    %s16 = sadd.s32 %s9, 1
    %s17 = ssub.s32 %s9, %s16
    %p18 = scmp.eq.s32.totalorder %s17, 0
    %s20 = sadd.s32 %s19, 1
    %s21 = scalar_select %p18, %s19, %s20
    %p24 = pneg %p18
    %p25 = scmp.eq.s32.totalorder %s9, 1
    %p26 = por %p24, %p25
    %p27 = scmp.ne.s32.totalorder %s19, %s22
    %p28 = scmp.eq.s32.totalorder %s9, 0
    %p29 = por %p27, %p28
    %p30 = scmp.ne.s32.totalorder %s19, %s22
    %p31 = scmp.eq.s32.totalorder %s14, 1
    %p32 = por %p30, %p31
    %p33 = scmp.ne.s32.totalorder %s22, %s23
    %p34 = scmp.eq.s32.totalorder %s14, 0
    %p35 = por %p33, %p34
    %p36 = scmp.ne.s32.totalorder %s22, %s23
    %p37 = scmp.eq.s32.totalorder %s15, 1
    %p38 = por %p36, %p37
    %p40 = scmp.ne.s32.totalorder %s23, %s39
    %p41 = scmp.eq.s32.totalorder %s15, 0
    %p42 = por %p40, %p41
    %s44 = sadd.s32 %s43, 1
    %p47 = scmp.eq.s32.totalorder %s9, 1
    %p48 = scmp.ne.s32.totalorder %s43, %s45
    %p49 = scmp.eq.s32.totalorder %s9, 0
    %p50 = por %p48, %p49
    %p51 = scmp.ne.s32.totalorder %s43, %s45
    %p52 = scmp.eq.s32.totalorder %s14, 1
    %p53 = por %p51, %p52
    %p54 = scmp.ne.s32.totalorder %s45, %s46
    %p55 = scmp.eq.s32.totalorder %s14, 0
    %p56 = por %p54, %p55
    %p57 = scmp.ne.s32.totalorder %s45, %s46
    %p58 = scmp.eq.s32.totalorder %s15, 1
    %p59 = por %p57, %p58
    %p61 = scmp.ne.s32.totalorder %s46, %s60
    %p62 = scmp.eq.s32.totalorder %s15, 0
    %p63 = por %p61, %p62
    %s65 = sadd.s32 %s64, 1
    %p68 = scmp.eq.s32.totalorder %s9, 1
    %p69 = scmp.ne.s32.totalorder %s64, %s66
    %p70 = scmp.eq.s32.totalorder %s9, 0
    %p71 = por %p69, %p70
    %p72 = scmp.ne.s32.totalorder %s64, %s66
    %p73 = scmp.eq.s32.totalorder %s14, 1
    %p74 = por %p72, %p73
    %p75 = scmp.ne.s32.totalorder %s66, %s67
    %p76 = scmp.eq.s32.totalorder %s14, 0
    %p77 = por %p75, %p76
    %p78 = scmp.ne.s32.totalorder %s66, %s67
    %p79 = scmp.eq.s32.totalorder %s15, 1
    %p80 = por %p78, %p79
    %p82 = scmp.ne.s32.totalorder %s67, %s81
    %p83 = scmp.eq.s32.totalorder %s15, 0
    %p84 = por %p82, %p83
    %s85 = ssub.s32 %s9, %s16
    %p86 = scmp.eq.s32.totalorder %s85, 0
    %s88 = sadd.s32 %s87, 1
    %s89 = scalar_select %p86, %s87, %s88
    %p92 = pneg %p86
    %p93 = scmp.eq.s32.totalorder %s9, 1
    %p94 = por %p92, %p93
    %p95 = scmp.ne.s32.totalorder %s87, %s90
    %p96 = scmp.eq.s32.totalorder %s9, 0
    %p97 = por %p95, %p96
    %p98 = scmp.ne.s32.totalorder %s87, %s90
    %p99 = scmp.eq.s32.totalorder %s14, 1
    %p100 = por %p98, %p99
    %p101 = scmp.ne.s32.totalorder %s90, %s91
    %p102 = scmp.eq.s32.totalorder %s14, 0
    %p103 = por %p101, %p102
    %p104 = scmp.ne.s32.totalorder %s90, %s91
    %p105 = scmp.eq.s32.totalorder %s15, 1
    %p106 = por %p104, %p105
    %p108 = scmp.ne.s32.totalorder %s91, %s107
    %p109 = scmp.eq.s32.totalorder %s15, 0
    %p110 = por %p108, %p109
    %p111 = scmp.le.s32.totalorder 1, %s9
    %p112 = scmp.lt.s32.totalorder %s9, 3
    %p113 = pnand %p111, %p112
    %p114 = pneg %p113
    // Predicated region
    $region9: #{tpu_custom_call.1} parent=5 // pred_check
      _
    $region10: #{tpu_custom_call.1} parent=5 // pred_check_branch
      %116 = sbr.rel (%p113) target = $region12
    $region11: #{tpu_custom_call.1} parent=5 // pred_region
      %s117 = ssub.s32 %s9, 1
      // Predicated region
      $region13: #{tpu_custom_call.1} parent=11 // pred_check
        %p118 = pneg %p56
      $region14: #{tpu_custom_call.1} parent=11 // pred_check_branch
        %120 = sbr.rel (%p118) target = $region16
      $region15: #{tpu_custom_call.1} parent=11 // pred_region
        _
      $region16: #{tpu_custom_call.1} parent=11 // pred_fallthru
        _
      // Predicated region
      $region17: #{tpu_custom_call.1} parent=11 // pred_check
        %p121 = pneg %p77
      $region18: #{tpu_custom_call.1} parent=11 // pred_check_branch
        %123 = sbr.rel (%p121) target = $region20
      $region19: #{tpu_custom_call.1} parent=11 // pred_region
        _
      $region20: #{tpu_custom_call.1} parent=11 // pred_fallthru
        _
    $region12: #{tpu_custom_call.1} parent=5 // pred_fallthru
      _
    %p124 = scmp.lt.s32.totalorder %s9, 2
    // Predicated region
    $region21: #{tpu_custom_call.1} parent=5 // pred_check
      %p125 = pneg %p124
    $region22: #{tpu_custom_call.1} parent=5 // pred_check_branch
      %127 = sbr.rel (%p125) target = $region24
    $region23: #{tpu_custom_call.1} parent=5 // pred_region
      // Predicated region
      $region25: #{tpu_custom_call.1} parent=23 // pred_check
        %p128 = pneg %p29
      $region26: #{tpu_custom_call.1} parent=23 // pred_check_branch
        %130 = sbr.rel (%p128) target = $region28
      $region27: #{tpu_custom_call.1} parent=23 // pred_region
        %s131 = smul.u32 5, %s9
        %p132 = scmp.lt.s32.totalorder %s131, 9
        %s133 = scalar_select %p132, %s131, 9
        %s134 = smul.addr %s133, 8
        %s135 = scalar_lea.vmem %s0, %s134
        %s136 = smul.u32 5, %s9
      $region28: #{tpu_custom_call.1} parent=23 // pred_fallthru
        _
    $region24: #{tpu_custom_call.1} parent=5 // pred_fallthru
      _
    %p137 = scmp.le.s32.totalorder 1, %s9
    %p138 = scmp.lt.s32.totalorder %s9, 3
    %p139 = pnand %p137, %p138
    %p140 = pneg %p139
    // Predicated region
    $region29: #{tpu_custom_call.1} parent=5 // pred_check
      _
    $region30: #{tpu_custom_call.1} parent=5 // pred_check_branch
      %142 = sbr.rel (%p139) target = $region32
    $region31: #{tpu_custom_call.1} parent=5 // pred_region
      %s143 = ssub.s32 %s9, 1
      %s144 = smul.u32 5, %s14
      %p145 = scmp.lt.s32.totalorder %s144, 9
      %s146 = scalar_select %p145, %s144, 9
      %s147 = smul.addr %s146, 8
      %s148 = scalar_lea.vmem %s0, %s147
      %p149 = pneg %p35
      %p150 = pneg %p32
      %p151 = pneg %p56
      %p152 = pneg %p53
      %p153 = pneg %p77
      %p154 = pneg %p74
      %p155 = pneg %p103
      %p156 = pneg %p100
      %s157 = smul.u32 5, %s14
      %p158 = scmp.lt.s32.totalorder %s157, 9
      %s159 = scalar_select %p158, %s157, 9
      %s160 = smul.addr %s159, 8
      %s161 = scalar_lea.vmem %s3, %s160
      %s162 = smul.u32 5, %s14
      %p163 = scmp.lt.s32.totalorder %s162, 9
      %s164 = scalar_select %p163, %s162, 9
      %s165 = smul.addr %s164, 8
      %s166 = scalar_lea.vmem %s0, %s165
      %s167 = smul.u32 5, %s14
      %s168 = smul.u32 5, %s14
      %p169 = scmp.lt.s32.totalorder %s168, 9
      %s170 = scalar_select %p169, %s168, 9
      %s171 = smul.addr %s170, 8
      %s172 = scalar_lea.vmem %s3, %s171
      %s173 = smul.u32 5, %s14
      %v174 = vld [vmem:[%s166] sm:$0xff]
      %v175 = vld [vmem:[%s166 + $0x8] sm:$0xff]
      %v176 = vld [vmem:[%s166 + $0x10] sm:$0xff]
      %v177 = vld [vmem:[%s166 + $0x18] sm:$0xff]
      %v178 = vld [vmem:[%s166 + $0x20] sm:$0xff]
      %v179 = vld [vmem:[%s1] sm:$0x7f]
      %v180 = vld [vmem:[%s1 + $0x8] sm:$0x7f]
      %v181 = vld [vmem:[%s1 + $0x10] sm:$0x7f]
      %v182 = vld [vmem:[%s1 + $0x18] sm:$0x7f]
      %v183 = vld [vmem:[%s1 + $0x20] sm:$0x7f]
      %v184 = vld [vmem:[%s1 + $0x28] sm:$0x7f]
      %v185 = vld [vmem:[%s1 + $0x30] sm:$0x7f]
      %v186 = vld [vmem:[%s1 + $0x38] sm:$0x7f]
      %v187 = vld [vmem:[%s1 + $0x40] sm:$0x7f]
      %v188 = vld [vmem:[%s1 + $0x48] sm:$0x7f]
      %v189 = vld [vmem:[%s1 + $0x50] sm:$0x7f]
      %v190 = vld [vmem:[%s1 + $0x58] sm:$0x7f]
      %v191 = vld [vmem:[%s1 + $0x60] sm:$0x7f]
      %v192 = vld [vmem:[%s1 + $0x68] sm:$0x7f]
      %v193 = vld [vmem:[%s1 + $0x70] sm:$0x7f]
      %v194 = vld [vmem:[%s1 + $0x78] sm:$0x7f]
      %vm195 = vcmask 56320
      %v197 = vsel %vm195, %v174, 0
      %v200 = vsel %vm195, %v175, 0
      %v203 = vsel %vm195, %v176, 0
      %v206 = vsel %vm195, %v177, 0
      %v209 = vsel %vm195, %v178, 0
      %vm211 = vcmask 1046528
      %v213 = vsel %vm211, %v179, 0
      %v216 = vsel %vm211, %v180, 0
      %v219 = vsel %vm211, %v181, 0
      %v222 = vsel %vm211, %v182, 0
      %v225 = vsel %vm211, %v183, 0
      %v228 = vsel %vm211, %v184, 0
      %v231 = vsel %vm211, %v185, 0
      %v234 = vsel %vm211, %v186, 0
      %v237 = vsel %vm211, %v187, 0
      %v240 = vsel %vm211, %v188, 0
      %v243 = vsel %vm211, %v189, 0
      %v246 = vsel %vm211, %v190, 0
      %v249 = vsel %vm211, %v191, 0
      %v252 = vsel %vm211, %v192, 0
      %v255 = vsel %vm211, %v193, 0
      %v258 = vsel %vm211, %v194, 0
      %260 = vmatprep.subr.mxu0 0.0
      %261 = vmatpush1.msra.mxu0 0.0
      %262 = vmatprep.subr.mxu0 0.0
      %263 = vmatpush1.msra.mxu0 0.0
      %264 = vmatprep.subr.mxu0 0.0
      %265 = vmatpush1.msra.mxu0 0.0
      %266 = vmatprep.subr.mxu0 0.0
      %267 = vmatpush1.msra.mxu0 0.0
      %268 = vmatprep.subr.mxu0 0.0
      %269 = vmatpush1.msra.mxu0 0.0
      %270 = vmatprep.subr.mxu0 0.0
      %271 = vmatpush1.msra.mxu0 0.0
      %272 = vmatprep.subr.mxu0 0.0
      %273 = vmatpush1.msra.mxu0 0.0
      %274 = vmatprep.subr.mxu0 0.0
      %275 = vmatpush1.msra.mxu0 0.0
      %276 = vmatprep.subr.mxu0 0.0
      %277 = vmatpush1.msra.mxu0 0.0
      %278 = vmatprep.subr.mxu0 0.0
      %279 = vmatpush1.msra.mxu0 0.0
      %280 = vmatprep.subr.mxu0 0.0
      %281 = vmatpush1.msra.mxu0 0.0
      %282 = vmatprep.subr.mxu0 0.0
      %283 = vmatpush1.msra.mxu0 0.0
      %284 = vmatprep.subr.mxu0 0.0
      %285 = vmatpush1.msra.mxu0 0.0
      %286 = vmatprep.subr.mxu0 0.0
      %287 = vmatpush1.msra.mxu0 0.0
      %288 = vmatprep.subr.mxu0 0.0
      %289 = vmatpush1.msra.mxu0 0.0
      %290 = vmatprep.subr.mxu0 %v216
      %291 = vmatpush1.msra.mxu0 %v213
      %292 = vmatprep.subr.mxu0 0.0
      %293 = vmatpush2.msra.mxu0 0.0
      %294 = vmatprep.subr.mxu0 0.0
      %295 = vmatpush2.msra.mxu0 0.0
      %296 = vmatprep.subr.mxu0 0.0
      %297 = vmatpush2.msra.mxu0 0.0
      %298 = vmatprep.subr.mxu0 0.0
      %299 = vmatpush2.msra.mxu0 0.0
      %300 = vmatprep.subr.mxu0 0.0
      %301 = vmatpush2.msra.mxu0 0.0
      %302 = vmatprep.subr.mxu0 0.0
      %303 = vmatpush2.msra.mxu0 0.0
      %304 = vmatprep.subr.mxu0 0.0
      %305 = vmatpush2.msra.mxu0 0.0
      %306 = vmatprep.subr.mxu0 0.0
      %307 = vmatpush2.msra.mxu0 0.0
      %308 = vmatprep.subr.mxu0 0.0
      %309 = vmatpush2.msra.mxu0 0.0
      %310 = vmatprep.subr.mxu0 0.0
      %311 = vmatpush2.msra.mxu0 0.0
      %312 = vmatprep.subr.mxu0 0.0
      %313 = vmatpush2.msra.mxu0 0.0
      %314 = vmatprep.subr.mxu0 0.0
      %315 = vmatpush2.msra.mxu0 0.0
      %316 = vmatprep.subr.mxu0 0.0
      %317 = vmatpush2.msra.mxu0 0.0
      %318 = vmatprep.subr.mxu0 0.0
      %319 = vmatpush2.msra.mxu0 0.0
      %320 = vmatprep.subr.mxu0 0.0
      %321 = vmatpush2.msra.mxu0 0.0
      %322 = vmatprep.subr.mxu0 0.0
      %323 = vmatpush2.msra.mxu0 0.0
      %324 = vmatprep.mubr.f32.mxu0 0.0
      %325 = vmatmul.mubr.f32.gmra.mxu0 %v197
      %v326 = vpop.f32.mrf.mxu0
      %v327 = vadd.f32 0.0, %v326
      %v328 = vpop.f32.mrf.mxu0
      %v329 = vadd.f32 0.0, %v328
      %330 = vmatprep.mubr.f32.mxu0 0.0
      %331 = vmatmul.mubr.f32.gmra.mxu0 %v200
      %v332 = vpop.f32.mrf.mxu0
      %v333 = vadd.f32 0.0, %v332
      %v334 = vpop.f32.mrf.mxu0
      %v335 = vadd.f32 0.0, %v334
      %336 = vmatprep.mubr.f32.mxu0 0.0
      %337 = vmatmul.mubr.f32.gmra.mxu0 %v203
      %v338 = vpop.f32.mrf.mxu0
      %v339 = vadd.f32 0.0, %v338
      %v340 = vpop.f32.mrf.mxu0
      %v341 = vadd.f32 0.0, %v340
      %342 = vmatprep.mubr.f32.mxu0 0.0
      %343 = vmatmul.mubr.f32.gmra.mxu0 %v206
      %v344 = vpop.f32.mrf.mxu0
      %v345 = vadd.f32 0.0, %v344
      %v346 = vpop.f32.mrf.mxu0
      %v347 = vadd.f32 0.0, %v346
      %348 = vmatprep.mubr.f32.mxu0 0.0
      %349 = vmatmul.mubr.f32.gmra.mxu0 %v209
      %v350 = vpop.f32.mrf.mxu0
      %v351 = vadd.f32 0.0, %v350
      %v352 = vpop.f32.mrf.mxu0
      %v353 = vadd.f32 0.0, %v352
      %354 = vdwg.mxu0
      %355 = vmatprep.subr.mxu0 0.0
      %356 = vmatpush1.msra.mxu0 0.0
      %357 = vmatprep.subr.mxu0 0.0
      %358 = vmatpush1.msra.mxu0 0.0
      %359 = vmatprep.subr.mxu0 0.0
      %360 = vmatpush1.msra.mxu0 0.0
      %361 = vmatprep.subr.mxu0 0.0
      %362 = vmatpush1.msra.mxu0 0.0
      %363 = vmatprep.subr.mxu0 0.0
      %364 = vmatpush1.msra.mxu0 0.0
      %365 = vmatprep.subr.mxu0 0.0
      %366 = vmatpush1.msra.mxu0 0.0
      %367 = vmatprep.subr.mxu0 0.0
      %368 = vmatpush1.msra.mxu0 0.0
      %369 = vmatprep.subr.mxu0 0.0
      %370 = vmatpush1.msra.mxu0 0.0
      %371 = vmatprep.subr.mxu0 0.0
      %372 = vmatpush1.msra.mxu0 0.0
      %373 = vmatprep.subr.mxu0 0.0
      %374 = vmatpush1.msra.mxu0 0.0
      %375 = vmatprep.subr.mxu0 0.0
      %376 = vmatpush1.msra.mxu0 0.0
      %377 = vmatprep.subr.mxu0 0.0
      %378 = vmatpush1.msra.mxu0 0.0
      %379 = vmatprep.subr.mxu0 0.0
      %380 = vmatpush1.msra.mxu0 0.0
      %381 = vmatprep.subr.mxu0 0.0
      %382 = vmatpush1.msra.mxu0 0.0
      %383 = vmatprep.subr.mxu0 0.0
      %384 = vmatpush1.msra.mxu0 0.0
      %385 = vmatprep.subr.mxu0 %v222
      %386 = vmatpush1.msra.mxu0 %v219
      %387 = vmatprep.subr.mxu0 0.0
      %388 = vmatpush2.msra.mxu0 0.0
      %389 = vmatprep.subr.mxu0 0.0
      %390 = vmatpush2.msra.mxu0 0.0
      %391 = vmatprep.subr.mxu0 0.0
      %392 = vmatpush2.msra.mxu0 0.0
      %393 = vmatprep.subr.mxu0 0.0
      %394 = vmatpush2.msra.mxu0 0.0
      %395 = vmatprep.subr.mxu0 0.0
      %396 = vmatpush2.msra.mxu0 0.0
      %397 = vmatprep.subr.mxu0 0.0
      %398 = vmatpush2.msra.mxu0 0.0
      %399 = vmatprep.subr.mxu0 0.0
      %400 = vmatpush2.msra.mxu0 0.0
      %401 = vmatprep.subr.mxu0 0.0
      %402 = vmatpush2.msra.mxu0 0.0
      %403 = vmatprep.subr.mxu0 0.0
      %404 = vmatpush2.msra.mxu0 0.0
      %405 = vmatprep.subr.mxu0 0.0
      %406 = vmatpush2.msra.mxu0 0.0
      %407 = vmatprep.subr.mxu0 0.0
      %408 = vmatpush2.msra.mxu0 0.0
      %409 = vmatprep.subr.mxu0 0.0
      %410 = vmatpush2.msra.mxu0 0.0
      %411 = vmatprep.subr.mxu0 0.0
      %412 = vmatpush2.msra.mxu0 0.0
      %413 = vmatprep.subr.mxu0 0.0
      %414 = vmatpush2.msra.mxu0 0.0
      %415 = vmatprep.subr.mxu0 0.0
      %416 = vmatpush2.msra.mxu0 0.0
      %417 = vmatprep.subr.mxu0 0.0
      %418 = vmatpush2.msra.mxu0 0.0
      %419 = vmatprep.mubr.f32.mxu0 0.0
      %420 = vmatmul.mubr.f32.gmra.mxu0 %v197
      %v421 = vpop.f32.mrf.mxu0
      %v422 = vadd.f32 0.0, %v421
      %v423 = vpop.f32.mrf.mxu0
      %v424 = vadd.f32 0.0, %v423
      %425 = vmatprep.mubr.f32.mxu0 0.0
      %426 = vmatmul.mubr.f32.gmra.mxu0 %v200
      %v427 = vpop.f32.mrf.mxu0
      %v428 = vadd.f32 0.0, %v427
      %v429 = vpop.f32.mrf.mxu0
      %v430 = vadd.f32 0.0, %v429
      %431 = vmatprep.mubr.f32.mxu0 0.0
      %432 = vmatmul.mubr.f32.gmra.mxu0 %v203
      %v433 = vpop.f32.mrf.mxu0
      %v434 = vadd.f32 0.0, %v433
      %v435 = vpop.f32.mrf.mxu0
      %v436 = vadd.f32 0.0, %v435
      %437 = vmatprep.mubr.f32.mxu0 0.0
      %438 = vmatmul.mubr.f32.gmra.mxu0 %v206
      %v439 = vpop.f32.mrf.mxu0
      %v440 = vadd.f32 0.0, %v439
      %v441 = vpop.f32.mrf.mxu0
      %v442 = vadd.f32 0.0, %v441
      %443 = vmatprep.mubr.f32.mxu0 0.0
      %444 = vmatmul.mubr.f32.gmra.mxu0 %v209
      %v445 = vpop.f32.mrf.mxu0
      %v446 = vadd.f32 0.0, %v445
      %v447 = vpop.f32.mrf.mxu0
      %v448 = vadd.f32 0.0, %v447
      %449 = vdwg.mxu0
      %450 = vmatprep.subr.mxu0 0.0
      %451 = vmatpush1.msra.mxu0 0.0
      %452 = vmatprep.subr.mxu0 0.0
      %453 = vmatpush1.msra.mxu0 0.0
      %454 = vmatprep.subr.mxu0 0.0
      %455 = vmatpush1.msra.mxu0 0.0
      %456 = vmatprep.subr.mxu0 0.0
      %457 = vmatpush1.msra.mxu0 0.0
      %458 = vmatprep.subr.mxu0 0.0
      %459 = vmatpush1.msra.mxu0 0.0
      %460 = vmatprep.subr.mxu0 0.0
      %461 = vmatpush1.msra.mxu0 0.0
      %462 = vmatprep.subr.mxu0 0.0
      %463 = vmatpush1.msra.mxu0 0.0
      %464 = vmatprep.subr.mxu0 0.0
      %465 = vmatpush1.msra.mxu0 0.0
      %466 = vmatprep.subr.mxu0 0.0
      %467 = vmatpush1.msra.mxu0 0.0
      %468 = vmatprep.subr.mxu0 0.0
      %469 = vmatpush1.msra.mxu0 0.0
      %470 = vmatprep.subr.mxu0 0.0
      %471 = vmatpush1.msra.mxu0 0.0
      %472 = vmatprep.subr.mxu0 0.0
      %473 = vmatpush1.msra.mxu0 0.0
      %474 = vmatprep.subr.mxu0 0.0
      %475 = vmatpush1.msra.mxu0 0.0
      %476 = vmatprep.subr.mxu0 0.0
      %477 = vmatpush1.msra.mxu0 0.0
      %478 = vmatprep.subr.mxu0 0.0
      %479 = vmatpush1.msra.mxu0 0.0
      %480 = vmatprep.subr.mxu0 %v228
      %481 = vmatpush1.msra.mxu0 %v225
      %482 = vmatprep.subr.mxu0 0.0
      %483 = vmatpush2.msra.mxu0 0.0
      %484 = vmatprep.subr.mxu0 0.0
      %485 = vmatpush2.msra.mxu0 0.0
      %486 = vmatprep.subr.mxu0 0.0
      %487 = vmatpush2.msra.mxu0 0.0
      %488 = vmatprep.subr.mxu0 0.0
      %489 = vmatpush2.msra.mxu0 0.0
      %490 = vmatprep.subr.mxu0 0.0
      %491 = vmatpush2.msra.mxu0 0.0
      %492 = vmatprep.subr.mxu0 0.0
      %493 = vmatpush2.msra.mxu0 0.0
      %494 = vmatprep.subr.mxu0 0.0
      %495 = vmatpush2.msra.mxu0 0.0
      %496 = vmatprep.subr.mxu0 0.0
      %497 = vmatpush2.msra.mxu0 0.0
      %498 = vmatprep.subr.mxu0 0.0
      %499 = vmatpush2.msra.mxu0 0.0
      %500 = vmatprep.subr.mxu0 0.0
      %501 = vmatpush2.msra.mxu0 0.0
      %502 = vmatprep.subr.mxu0 0.0
      %503 = vmatpush2.msra.mxu0 0.0
      %504 = vmatprep.subr.mxu0 0.0
      %505 = vmatpush2.msra.mxu0 0.0
      %506 = vmatprep.subr.mxu0 0.0
      %507 = vmatpush2.msra.mxu0 0.0
      %508 = vmatprep.subr.mxu0 0.0
      %509 = vmatpush2.msra.mxu0 0.0
      %510 = vmatprep.subr.mxu0 0.0
      %511 = vmatpush2.msra.mxu0 0.0
      %512 = vmatprep.subr.mxu0 0.0
      %513 = vmatpush2.msra.mxu0 0.0
      %514 = vmatprep.mubr.f32.mxu0 0.0
      %515 = vmatmul.mubr.f32.gmra.mxu0 %v197
      %v516 = vpop.f32.mrf.mxu0
      %v517 = vadd.f32 0.0, %v516
      %v518 = vpop.f32.mrf.mxu0
      %v519 = vadd.f32 0.0, %v518
      %520 = vmatprep.mubr.f32.mxu0 0.0
      %521 = vmatmul.mubr.f32.gmra.mxu0 %v200
      %v522 = vpop.f32.mrf.mxu0
      %v523 = vadd.f32 0.0, %v522
      %v524 = vpop.f32.mrf.mxu0
      %v525 = vadd.f32 0.0, %v524
      %526 = vmatprep.mubr.f32.mxu0 0.0
      %527 = vmatmul.mubr.f32.gmra.mxu0 %v203
      %v528 = vpop.f32.mrf.mxu0
      %v529 = vadd.f32 0.0, %v528
      %v530 = vpop.f32.mrf.mxu0
      %v531 = vadd.f32 0.0, %v530
      %532 = vmatprep.mubr.f32.mxu0 0.0
      %533 = vmatmul.mubr.f32.gmra.mxu0 %v206
      %v534 = vpop.f32.mrf.mxu0
      %v535 = vadd.f32 0.0, %v534
      %v536 = vpop.f32.mrf.mxu0
      %v537 = vadd.f32 0.0, %v536
      %538 = vmatprep.mubr.f32.mxu0 0.0
      %539 = vmatmul.mubr.f32.gmra.mxu0 %v209
      %v540 = vpop.f32.mrf.mxu0
      %v541 = vadd.f32 0.0, %v540
      %v542 = vpop.f32.mrf.mxu0
      %v543 = vadd.f32 0.0, %v542
      %544 = vdwg.mxu0
      %545 = vmatprep.subr.mxu0 0.0
      %546 = vmatpush1.msra.mxu0 0.0
      %547 = vmatprep.subr.mxu0 0.0
      %548 = vmatpush1.msra.mxu0 0.0
      %549 = vmatprep.subr.mxu0 0.0
      %550 = vmatpush1.msra.mxu0 0.0
      %551 = vmatprep.subr.mxu0 0.0
      %552 = vmatpush1.msra.mxu0 0.0
      %553 = vmatprep.subr.mxu0 0.0
      %554 = vmatpush1.msra.mxu0 0.0
      %555 = vmatprep.subr.mxu0 0.0
      %556 = vmatpush1.msra.mxu0 0.0
      %557 = vmatprep.subr.mxu0 0.0
      %558 = vmatpush1.msra.mxu0 0.0
      %559 = vmatprep.subr.mxu0 0.0
      %560 = vmatpush1.msra.mxu0 0.0
      %561 = vmatprep.subr.mxu0 0.0
      %562 = vmatpush1.msra.mxu0 0.0
      %563 = vmatprep.subr.mxu0 0.0
      %564 = vmatpush1.msra.mxu0 0.0
      %565 = vmatprep.subr.mxu0 0.0
      %566 = vmatpush1.msra.mxu0 0.0
      %567 = vmatprep.subr.mxu0 0.0
      %568 = vmatpush1.msra.mxu0 0.0
      %569 = vmatprep.subr.mxu0 0.0
      %570 = vmatpush1.msra.mxu0 0.0
      %571 = vmatprep.subr.mxu0 0.0
      %572 = vmatpush1.msra.mxu0 0.0
      %573 = vmatprep.subr.mxu0 0.0
      %574 = vmatpush1.msra.mxu0 0.0
      %575 = vmatprep.subr.mxu0 %v234
      %576 = vmatpush1.msra.mxu0 %v231
      %577 = vmatprep.subr.mxu0 0.0
      %578 = vmatpush2.msra.mxu0 0.0
      %579 = vmatprep.subr.mxu0 0.0
      %580 = vmatpush2.msra.mxu0 0.0
      %581 = vmatprep.subr.mxu0 0.0
      %582 = vmatpush2.msra.mxu0 0.0
      %583 = vmatprep.subr.mxu0 0.0
      %584 = vmatpush2.msra.mxu0 0.0
      %585 = vmatprep.subr.mxu0 0.0
      %586 = vmatpush2.msra.mxu0 0.0
      %587 = vmatprep.subr.mxu0 0.0
      %588 = vmatpush2.msra.mxu0 0.0
      %589 = vmatprep.subr.mxu0 0.0
      %590 = vmatpush2.msra.mxu0 0.0
      %591 = vmatprep.subr.mxu0 0.0
      %592 = vmatpush2.msra.mxu0 0.0
      %593 = vmatprep.subr.mxu0 0.0
      %594 = vmatpush2.msra.mxu0 0.0
      %595 = vmatprep.subr.mxu0 0.0
      %596 = vmatpush2.msra.mxu0 0.0
      %597 = vmatprep.subr.mxu0 0.0
      %598 = vmatpush2.msra.mxu0 0.0
      %599 = vmatprep.subr.mxu0 0.0
      %600 = vmatpush2.msra.mxu0 0.0
      %601 = vmatprep.subr.mxu0 0.0
      %602 = vmatpush2.msra.mxu0 0.0
      %603 = vmatprep.subr.mxu0 0.0
      %604 = vmatpush2.msra.mxu0 0.0
      %605 = vmatprep.subr.mxu0 0.0
      %606 = vmatpush2.msra.mxu0 0.0
      %607 = vmatprep.subr.mxu0 0.0
      %608 = vmatpush2.msra.mxu0 0.0
      %609 = vmatprep.mubr.f32.mxu0 0.0
      %610 = vmatmul.mubr.f32.gmra.mxu0 %v197
      %v611 = vpop.f32.mrf.mxu0
      %v612 = vadd.f32 0.0, %v611
      %v613 = vpop.f32.mrf.mxu0
      %v614 = vadd.f32 0.0, %v613
      %615 = vmatprep.mubr.f32.mxu0 0.0
      %616 = vmatmul.mubr.f32.gmra.mxu0 %v200
      %v617 = vpop.f32.mrf.mxu0
      %v618 = vadd.f32 0.0, %v617
      %v619 = vpop.f32.mrf.mxu0
      %v620 = vadd.f32 0.0, %v619
      %621 = vmatprep.mubr.f32.mxu0 0.0
      %622 = vmatmul.mubr.f32.gmra.mxu0 %v203
      %v623 = vpop.f32.mrf.mxu0
      %v624 = vadd.f32 0.0, %v623
      %v625 = vpop.f32.mrf.mxu0
      %v626 = vadd.f32 0.0, %v625
      %627 = vmatprep.mubr.f32.mxu0 0.0
      %628 = vmatmul.mubr.f32.gmra.mxu0 %v206
      %v629 = vpop.f32.mrf.mxu0
      %v630 = vadd.f32 0.0, %v629
      %v631 = vpop.f32.mrf.mxu0
      %v632 = vadd.f32 0.0, %v631
      %633 = vmatprep.mubr.f32.mxu0 0.0
      %634 = vmatmul.mubr.f32.gmra.mxu0 %v209
      %v635 = vpop.f32.mrf.mxu0
      %v636 = vadd.f32 0.0, %v635
      %v637 = vpop.f32.mrf.mxu0
      %v638 = vadd.f32 0.0, %v637
      %639 = vdwg.mxu0
      %640 = vmatprep.subr.mxu0 0.0
      %641 = vmatpush1.msra.mxu0 0.0
      %642 = vmatprep.subr.mxu0 0.0
      %643 = vmatpush1.msra.mxu0 0.0
      %644 = vmatprep.subr.mxu0 0.0
      %645 = vmatpush1.msra.mxu0 0.0
      %646 = vmatprep.subr.mxu0 0.0
      %647 = vmatpush1.msra.mxu0 0.0
      %648 = vmatprep.subr.mxu0 0.0
      %649 = vmatpush1.msra.mxu0 0.0
      %650 = vmatprep.subr.mxu0 0.0
      %651 = vmatpush1.msra.mxu0 0.0
      %652 = vmatprep.subr.mxu0 0.0
      %653 = vmatpush1.msra.mxu0 0.0
      %654 = vmatprep.subr.mxu0 0.0
      %655 = vmatpush1.msra.mxu0 0.0
      %656 = vmatprep.subr.mxu0 0.0
      %657 = vmatpush1.msra.mxu0 0.0
      %658 = vmatprep.subr.mxu0 0.0
      %659 = vmatpush1.msra.mxu0 0.0
      %660 = vmatprep.subr.mxu0 0.0
      %661 = vmatpush1.msra.mxu0 0.0
      %662 = vmatprep.subr.mxu0 0.0
      %663 = vmatpush1.msra.mxu0 0.0
      %664 = vmatprep.subr.mxu0 0.0
      %665 = vmatpush1.msra.mxu0 0.0
      %666 = vmatprep.subr.mxu0 0.0
      %667 = vmatpush1.msra.mxu0 0.0
      %668 = vmatprep.subr.mxu0 0.0
      %669 = vmatpush1.msra.mxu0 0.0
      %670 = vmatprep.subr.mxu0 %v240
      %671 = vmatpush1.msra.mxu0 %v237
      %672 = vmatprep.subr.mxu0 0.0
      %673 = vmatpush2.msra.mxu0 0.0
      %674 = vmatprep.subr.mxu0 0.0
      %675 = vmatpush2.msra.mxu0 0.0
      %676 = vmatprep.subr.mxu0 0.0
      %677 = vmatpush2.msra.mxu0 0.0
      %678 = vmatprep.subr.mxu0 0.0
      %679 = vmatpush2.msra.mxu0 0.0
      %680 = vmatprep.subr.mxu0 0.0
      %681 = vmatpush2.msra.mxu0 0.0
      %682 = vmatprep.subr.mxu0 0.0
      %683 = vmatpush2.msra.mxu0 0.0
      %684 = vmatprep.subr.mxu0 0.0
      %685 = vmatpush2.msra.mxu0 0.0
      %686 = vmatprep.subr.mxu0 0.0
      %687 = vmatpush2.msra.mxu0 0.0
      %688 = vmatprep.subr.mxu0 0.0
      %689 = vmatpush2.msra.mxu0 0.0
      %690 = vmatprep.subr.mxu0 0.0
      %691 = vmatpush2.msra.mxu0 0.0
      %692 = vmatprep.subr.mxu0 0.0
      %693 = vmatpush2.msra.mxu0 0.0
      %694 = vmatprep.subr.mxu0 0.0
      %695 = vmatpush2.msra.mxu0 0.0
      %696 = vmatprep.subr.mxu0 0.0
      %697 = vmatpush2.msra.mxu0 0.0
      %698 = vmatprep.subr.mxu0 0.0
      %699 = vmatpush2.msra.mxu0 0.0
      %700 = vmatprep.subr.mxu0 0.0
      %701 = vmatpush2.msra.mxu0 0.0
      %702 = vmatprep.subr.mxu0 0.0
      %703 = vmatpush2.msra.mxu0 0.0
      %704 = vmatprep.mubr.f32.mxu0 0.0
      %705 = vmatmul.mubr.f32.gmra.mxu0 %v197
      %v706 = vpop.f32.mrf.mxu0
      %v707 = vadd.f32 0.0, %v706
      %v708 = vpop.f32.mrf.mxu0
      %v709 = vadd.f32 0.0, %v708
      %710 = vmatprep.mubr.f32.mxu0 0.0
      %711 = vmatmul.mubr.f32.gmra.mxu0 %v200
      %v712 = vpop.f32.mrf.mxu0
      %v713 = vadd.f32 0.0, %v712
      %v714 = vpop.f32.mrf.mxu0
      %v715 = vadd.f32 0.0, %v714
      %716 = vmatprep.mubr.f32.mxu0 0.0
      %717 = vmatmul.mubr.f32.gmra.mxu0 %v203
      %v718 = vpop.f32.mrf.mxu0
      %v719 = vadd.f32 0.0, %v718
      %v720 = vpop.f32.mrf.mxu0
      %v721 = vadd.f32 0.0, %v720
      %722 = vmatprep.mubr.f32.mxu0 0.0
      %723 = vmatmul.mubr.f32.gmra.mxu0 %v206
      %v724 = vpop.f32.mrf.mxu0
      %v725 = vadd.f32 0.0, %v724
      %v726 = vpop.f32.mrf.mxu0
      %v727 = vadd.f32 0.0, %v726
      %728 = vmatprep.mubr.f32.mxu0 0.0
      %729 = vmatmul.mubr.f32.gmra.mxu0 %v209
      %v730 = vpop.f32.mrf.mxu0
      %v731 = vadd.f32 0.0, %v730
      %v732 = vpop.f32.mrf.mxu0
      %v733 = vadd.f32 0.0, %v732
      %734 = vdwg.mxu0
      %735 = vmatprep.subr.mxu0 0.0
      %736 = vmatpush1.msra.mxu0 0.0
      %737 = vmatprep.subr.mxu0 0.0
      %738 = vmatpush1.msra.mxu0 0.0
      %739 = vmatprep.subr.mxu0 0.0
      %740 = vmatpush1.msra.mxu0 0.0
      %741 = vmatprep.subr.mxu0 0.0
      %742 = vmatpush1.msra.mxu0 0.0
      %743 = vmatprep.subr.mxu0 0.0
      %744 = vmatpush1.msra.mxu0 0.0
      %745 = vmatprep.subr.mxu0 0.0
      %746 = vmatpush1.msra.mxu0 0.0
      %747 = vmatprep.subr.mxu0 0.0
      %748 = vmatpush1.msra.mxu0 0.0
      %749 = vmatprep.subr.mxu0 0.0
      %750 = vmatpush1.msra.mxu0 0.0
      %751 = vmatprep.subr.mxu0 0.0
      %752 = vmatpush1.msra.mxu0 0.0
      %753 = vmatprep.subr.mxu0 0.0
      %754 = vmatpush1.msra.mxu0 0.0
      %755 = vmatprep.subr.mxu0 0.0
      %756 = vmatpush1.msra.mxu0 0.0
      %757 = vmatprep.subr.mxu0 0.0
      %758 = vmatpush1.msra.mxu0 0.0
      %759 = vmatprep.subr.mxu0 0.0
      %760 = vmatpush1.msra.mxu0 0.0
      %761 = vmatprep.subr.mxu0 0.0
      %762 = vmatpush1.msra.mxu0 0.0
      %763 = vmatprep.subr.mxu0 0.0
      %764 = vmatpush1.msra.mxu0 0.0
      %765 = vmatprep.subr.mxu0 %v246
      %766 = vmatpush1.msra.mxu0 %v243
      %767 = vmatprep.subr.mxu0 0.0
      %768 = vmatpush2.msra.mxu0 0.0
      %769 = vmatprep.subr.mxu0 0.0
      %770 = vmatpush2.msra.mxu0 0.0
      %771 = vmatprep.subr.mxu0 0.0
      %772 = vmatpush2.msra.mxu0 0.0
      %773 = vmatprep.subr.mxu0 0.0
      %774 = vmatpush2.msra.mxu0 0.0
      %775 = vmatprep.subr.mxu0 0.0
      %776 = vmatpush2.msra.mxu0 0.0
      %777 = vmatprep.subr.mxu0 0.0
      %778 = vmatpush2.msra.mxu0 0.0
      %779 = vmatprep.subr.mxu0 0.0
      %780 = vmatpush2.msra.mxu0 0.0
      %781 = vmatprep.subr.mxu0 0.0
      %782 = vmatpush2.msra.mxu0 0.0
      %783 = vmatprep.subr.mxu0 0.0
      %784 = vmatpush2.msra.mxu0 0.0
      %785 = vmatprep.subr.mxu0 0.0
      %786 = vmatpush2.msra.mxu0 0.0
      %787 = vmatprep.subr.mxu0 0.0
      %788 = vmatpush2.msra.mxu0 0.0
      %789 = vmatprep.subr.mxu0 0.0
      %790 = vmatpush2.msra.mxu0 0.0
      %791 = vmatprep.subr.mxu0 0.0
      %792 = vmatpush2.msra.mxu0 0.0
      %793 = vmatprep.subr.mxu0 0.0
      %794 = vmatpush2.msra.mxu0 0.0
      %795 = vmatprep.subr.mxu0 0.0
      %796 = vmatpush2.msra.mxu0 0.0
      %797 = vmatprep.subr.mxu0 0.0
      %798 = vmatpush2.msra.mxu0 0.0
      %799 = vmatprep.mubr.f32.mxu0 0.0
      %800 = vmatmul.mubr.f32.gmra.mxu0 %v197
      %v801 = vpop.f32.mrf.mxu0
      %v802 = vadd.f32 0.0, %v801
      %v803 = vpop.f32.mrf.mxu0
      %v804 = vadd.f32 0.0, %v803
      %805 = vmatprep.mubr.f32.mxu0 0.0
      %806 = vmatmul.mubr.f32.gmra.mxu0 %v200
      %v807 = vpop.f32.mrf.mxu0
      %v808 = vadd.f32 0.0, %v807
      %v809 = vpop.f32.mrf.mxu0
      %v810 = vadd.f32 0.0, %v809
      %811 = vmatprep.mubr.f32.mxu0 0.0
      %812 = vmatmul.mubr.f32.gmra.mxu0 %v203
      %v813 = vpop.f32.mrf.mxu0
      %v814 = vadd.f32 0.0, %v813
      %v815 = vpop.f32.mrf.mxu0
      %v816 = vadd.f32 0.0, %v815
      %817 = vmatprep.mubr.f32.mxu0 0.0
      %818 = vmatmul.mubr.f32.gmra.mxu0 %v206
      %v819 = vpop.f32.mrf.mxu0
      %v820 = vadd.f32 0.0, %v819
      %v821 = vpop.f32.mrf.mxu0
      %v822 = vadd.f32 0.0, %v821
      %823 = vmatprep.mubr.f32.mxu0 0.0
      %824 = vmatmul.mubr.f32.gmra.mxu0 %v209
      %v825 = vpop.f32.mrf.mxu0
      %v826 = vadd.f32 0.0, %v825
      %v827 = vpop.f32.mrf.mxu0
      %v828 = vadd.f32 0.0, %v827
      %829 = vdwg.mxu0
      %830 = vmatprep.subr.mxu0 0.0
      %831 = vmatpush1.msra.mxu0 0.0
      %832 = vmatprep.subr.mxu0 0.0
      %833 = vmatpush1.msra.mxu0 0.0
      %834 = vmatprep.subr.mxu0 0.0
      %835 = vmatpush1.msra.mxu0 0.0
      %836 = vmatprep.subr.mxu0 0.0
      %837 = vmatpush1.msra.mxu0 0.0
      %838 = vmatprep.subr.mxu0 0.0
      %839 = vmatpush1.msra.mxu0 0.0
      %840 = vmatprep.subr.mxu0 0.0
      %841 = vmatpush1.msra.mxu0 0.0
      %842 = vmatprep.subr.mxu0 0.0
      %843 = vmatpush1.msra.mxu0 0.0
      %844 = vmatprep.subr.mxu0 0.0
      %845 = vmatpush1.msra.mxu0 0.0
      %846 = vmatprep.subr.mxu0 0.0
      %847 = vmatpush1.msra.mxu0 0.0
      %848 = vmatprep.subr.mxu0 0.0
      %849 = vmatpush1.msra.mxu0 0.0
      %850 = vmatprep.subr.mxu0 0.0
      %851 = vmatpush1.msra.mxu0 0.0
      %852 = vmatprep.subr.mxu0 0.0
      %853 = vmatpush1.msra.mxu0 0.0
      %854 = vmatprep.subr.mxu0 0.0
      %855 = vmatpush1.msra.mxu0 0.0
      %856 = vmatprep.subr.mxu0 0.0
      %857 = vmatpush1.msra.mxu0 0.0
      %858 = vmatprep.subr.mxu0 0.0
      %859 = vmatpush1.msra.mxu0 0.0
      %860 = vmatprep.subr.mxu0 %v252
      %861 = vmatpush1.msra.mxu0 %v249
      %862 = vmatprep.subr.mxu0 0.0
      %863 = vmatpush2.msra.mxu0 0.0
      %864 = vmatprep.subr.mxu0 0.0
      %865 = vmatpush2.msra.mxu0 0.0
      %866 = vmatprep.subr.mxu0 0.0
      %867 = vmatpush2.msra.mxu0 0.0
      %868 = vmatprep.subr.mxu0 0.0
      %869 = vmatpush2.msra.mxu0 0.0
      %870 = vmatprep.subr.mxu0 0.0
      %871 = vmatpush2.msra.mxu0 0.0
      %872 = vmatprep.subr.mxu0 0.0
      %873 = vmatpush2.msra.mxu0 0.0
      %874 = vmatprep.subr.mxu0 0.0
      %875 = vmatpush2.msra.mxu0 0.0
      %876 = vmatprep.subr.mxu0 0.0
      %877 = vmatpush2.msra.mxu0 0.0
      %878 = vmatprep.subr.mxu0 0.0
      %879 = vmatpush2.msra.mxu0 0.0
      %880 = vmatprep.subr.mxu0 0.0
      %881 = vmatpush2.msra.mxu0 0.0
      %882 = vmatprep.subr.mxu0 0.0
      %883 = vmatpush2.msra.mxu0 0.0
      %884 = vmatprep.subr.mxu0 0.0
      %885 = vmatpush2.msra.mxu0 0.0
      %886 = vmatprep.subr.mxu0 0.0
      %887 = vmatpush2.msra.mxu0 0.0
      %888 = vmatprep.subr.mxu0 0.0
      %889 = vmatpush2.msra.mxu0 0.0
      %890 = vmatprep.subr.mxu0 0.0
      %891 = vmatpush2.msra.mxu0 0.0
      %892 = vmatprep.subr.mxu0 0.0
      %893 = vmatpush2.msra.mxu0 0.0
      %894 = vmatprep.mubr.f32.mxu0 0.0
      %895 = vmatmul.mubr.f32.gmra.mxu0 %v197
      %v896 = vpop.f32.mrf.mxu0
      %v897 = vadd.f32 0.0, %v896
      %v898 = vpop.f32.mrf.mxu0
      %v899 = vadd.f32 0.0, %v898
      %900 = vmatprep.mubr.f32.mxu0 0.0
      %901 = vmatmul.mubr.f32.gmra.mxu0 %v200
      %v902 = vpop.f32.mrf.mxu0
      %v903 = vadd.f32 0.0, %v902
      %v904 = vpop.f32.mrf.mxu0
      %v905 = vadd.f32 0.0, %v904
      %906 = vmatprep.mubr.f32.mxu0 0.0
      %907 = vmatmul.mubr.f32.gmra.mxu0 %v203
      %v908 = vpop.f32.mrf.mxu0
      %v909 = vadd.f32 0.0, %v908
      %v910 = vpop.f32.mrf.mxu0
      %v911 = vadd.f32 0.0, %v910
      %912 = vmatprep.mubr.f32.mxu0 0.0
      %913 = vmatmul.mubr.f32.gmra.mxu0 %v206
      %v914 = vpop.f32.mrf.mxu0
      %v915 = vadd.f32 0.0, %v914
      %v916 = vpop.f32.mrf.mxu0
      %v917 = vadd.f32 0.0, %v916
      %918 = vmatprep.mubr.f32.mxu0 0.0
      %919 = vmatmul.mubr.f32.gmra.mxu0 %v209
      %v920 = vpop.f32.mrf.mxu0
      %v921 = vadd.f32 0.0, %v920
      %v922 = vpop.f32.mrf.mxu0
      %v923 = vadd.f32 0.0, %v922
      %924 = vdwg.mxu0
      %925 = vmatprep.subr.mxu0 0.0
      %926 = vmatpush1.msra.mxu0 0.0
      %927 = vmatprep.subr.mxu0 0.0
      %928 = vmatpush1.msra.mxu0 0.0
      %929 = vmatprep.subr.mxu0 0.0
      %930 = vmatpush1.msra.mxu0 0.0
      %931 = vmatprep.subr.mxu0 0.0
      %932 = vmatpush1.msra.mxu0 0.0
      %933 = vmatprep.subr.mxu0 0.0
      %934 = vmatpush1.msra.mxu0 0.0
      %935 = vmatprep.subr.mxu0 0.0
      %936 = vmatpush1.msra.mxu0 0.0
      %937 = vmatprep.subr.mxu0 0.0
      %938 = vmatpush1.msra.mxu0 0.0
      %939 = vmatprep.subr.mxu0 0.0
      %940 = vmatpush1.msra.mxu0 0.0
      %941 = vmatprep.subr.mxu0 0.0
      %942 = vmatpush1.msra.mxu0 0.0
      %943 = vmatprep.subr.mxu0 0.0
      %944 = vmatpush1.msra.mxu0 0.0
      %945 = vmatprep.subr.mxu0 0.0
      %946 = vmatpush1.msra.mxu0 0.0
      %947 = vmatprep.subr.mxu0 0.0
      %948 = vmatpush1.msra.mxu0 0.0
      %949 = vmatprep.subr.mxu0 0.0
      %950 = vmatpush1.msra.mxu0 0.0
      %951 = vmatprep.subr.mxu0 0.0
      %952 = vmatpush1.msra.mxu0 0.0
      %953 = vmatprep.subr.mxu0 0.0
      %954 = vmatpush1.msra.mxu0 0.0
      %955 = vmatprep.subr.mxu0 %v258
      %956 = vmatpush1.msra.mxu0 %v255
      %957 = vmatprep.subr.mxu0 0.0
      %958 = vmatpush2.msra.mxu0 0.0
      %959 = vmatprep.subr.mxu0 0.0
      %960 = vmatpush2.msra.mxu0 0.0
      %961 = vmatprep.subr.mxu0 0.0
      %962 = vmatpush2.msra.mxu0 0.0
      %963 = vmatprep.subr.mxu0 0.0
      %964 = vmatpush2.msra.mxu0 0.0
      %965 = vmatprep.subr.mxu0 0.0
      %966 = vmatpush2.msra.mxu0 0.0
      %967 = vmatprep.subr.mxu0 0.0
      %968 = vmatpush2.msra.mxu0 0.0
      %969 = vmatprep.subr.mxu0 0.0
      %970 = vmatpush2.msra.mxu0 0.0
      %971 = vmatprep.subr.mxu0 0.0
      %972 = vmatpush2.msra.mxu0 0.0
      %973 = vmatprep.subr.mxu0 0.0
      %974 = vmatpush2.msra.mxu0 0.0
      %975 = vmatprep.subr.mxu0 0.0
      %976 = vmatpush2.msra.mxu0 0.0
      %977 = vmatprep.subr.mxu0 0.0
      %978 = vmatpush2.msra.mxu0 0.0
      %979 = vmatprep.subr.mxu0 0.0
      %980 = vmatpush2.msra.mxu0 0.0
      %981 = vmatprep.subr.mxu0 0.0
      %982 = vmatpush2.msra.mxu0 0.0
      %983 = vmatprep.subr.mxu0 0.0
      %984 = vmatpush2.msra.mxu0 0.0
      %985 = vmatprep.subr.mxu0 0.0
      %986 = vmatpush2.msra.mxu0 0.0
      %987 = vmatprep.subr.mxu0 0.0
      %988 = vmatpush2.msra.mxu0 0.0
      %989 = vmatprep.mubr.f32.mxu0 0.0
      %990 = vmatmul.mubr.f32.gmra.mxu0 %v197
      %v991 = vpop.f32.mrf.mxu0
      %v992 = vadd.f32 0.0, %v991
      %v993 = vpop.f32.mrf.mxu0
      %v994 = vadd.f32 0.0, %v993
      %995 = vmatprep.mubr.f32.mxu0 0.0
      %996 = vmatmul.mubr.f32.gmra.mxu0 %v200
      %v997 = vpop.f32.mrf.mxu0
      %v998 = vadd.f32 0.0, %v997
      %v999 = vpop.f32.mrf.mxu0
      %v1000 = vadd.f32 0.0, %v999
      %1001 = vmatprep.mubr.f32.mxu0 0.0
      %1002 = vmatmul.mubr.f32.gmra.mxu0 %v203
      %v1003 = vpop.f32.mrf.mxu0
      %v1004 = vadd.f32 0.0, %v1003
      %v1005 = vpop.f32.mrf.mxu0
      %v1006 = vadd.f32 0.0, %v1005
      %1007 = vmatprep.mubr.f32.mxu0 0.0
      %1008 = vmatmul.mubr.f32.gmra.mxu0 %v206
      %v1009 = vpop.f32.mrf.mxu0
      %v1010 = vadd.f32 0.0, %v1009
      %v1011 = vpop.f32.mrf.mxu0
      %v1012 = vadd.f32 0.0, %v1011
      %1013 = vmatprep.mubr.f32.mxu0 0.0
      %1014 = vmatmul.mubr.f32.gmra.mxu0 %v209
      %v1015 = vpop.f32.mrf.mxu0
      %v1016 = vadd.f32 0.0, %v1015
      %v1017 = vpop.f32.mrf.mxu0
      %v1018 = vadd.f32 0.0, %v1017
      %1019 = vdwg.mxu0
      %v1020 = vmax.f32 %v327, 0.0
      %v1021 = vmax.f32 %v329, 0.0
      %v1022 = vmax.f32 %v422, 0.0
      %v1023 = vmax.f32 %v424, 0.0
      %v1024 = vmax.f32 %v517, 0.0
      %v1025 = vmax.f32 %v519, 0.0
      %v1026 = vmax.f32 %v612, 0.0
      %v1027 = vmax.f32 %v614, 0.0
      %v1028 = vmax.f32 %v707, 0.0
      %v1029 = vmax.f32 %v709, 0.0
      %v1030 = vmax.f32 %v802, 0.0
      %v1031 = vmax.f32 %v804, 0.0
      %v1032 = vmax.f32 %v897, 0.0
      %v1033 = vmax.f32 %v899, 0.0
      %v1034 = vmax.f32 %v992, 0.0
      %v1035 = vmax.f32 %v994, 0.0
      %v1036 = vmax.f32 %v333, 0.0
      %v1037 = vmax.f32 %v335, 0.0
      %v1038 = vmax.f32 %v428, 0.0
      %v1039 = vmax.f32 %v430, 0.0
      %v1040 = vmax.f32 %v523, 0.0
      %v1041 = vmax.f32 %v525, 0.0
      %v1042 = vmax.f32 %v618, 0.0
      %v1043 = vmax.f32 %v620, 0.0
      %v1044 = vmax.f32 %v713, 0.0
      %v1045 = vmax.f32 %v715, 0.0
      %v1046 = vmax.f32 %v808, 0.0
      %v1047 = vmax.f32 %v810, 0.0
      %v1048 = vmax.f32 %v903, 0.0
      %v1049 = vmax.f32 %v905, 0.0
      %v1050 = vmax.f32 %v998, 0.0
      %v1051 = vmax.f32 %v1000, 0.0
      %v1052 = vmax.f32 %v339, 0.0
      %v1053 = vmax.f32 %v341, 0.0
      %v1054 = vmax.f32 %v434, 0.0
      %v1055 = vmax.f32 %v436, 0.0
      %v1056 = vmax.f32 %v529, 0.0
      %v1057 = vmax.f32 %v531, 0.0
      %v1058 = vmax.f32 %v624, 0.0
      %v1059 = vmax.f32 %v626, 0.0
      %v1060 = vmax.f32 %v719, 0.0
      %v1061 = vmax.f32 %v721, 0.0
      %v1062 = vmax.f32 %v814, 0.0
      %v1063 = vmax.f32 %v816, 0.0
      %v1064 = vmax.f32 %v909, 0.0
      %v1065 = vmax.f32 %v911, 0.0
      %v1066 = vmax.f32 %v1004, 0.0
      %v1067 = vmax.f32 %v1006, 0.0
      %v1068 = vmax.f32 %v345, 0.0
      %v1069 = vmax.f32 %v347, 0.0
      %v1070 = vmax.f32 %v440, 0.0
      %v1071 = vmax.f32 %v442, 0.0
      %v1072 = vmax.f32 %v535, 0.0
      %v1073 = vmax.f32 %v537, 0.0
      %v1074 = vmax.f32 %v630, 0.0
      %v1075 = vmax.f32 %v632, 0.0
      %v1076 = vmax.f32 %v725, 0.0
      %v1077 = vmax.f32 %v727, 0.0
      %v1078 = vmax.f32 %v820, 0.0
      %v1079 = vmax.f32 %v822, 0.0
      %v1080 = vmax.f32 %v915, 0.0
      %v1081 = vmax.f32 %v917, 0.0
      %v1082 = vmax.f32 %v1010, 0.0
      %v1083 = vmax.f32 %v1012, 0.0
      %v1084 = vmax.f32 %v351, 0.0
      %v1085 = vmax.f32 %v353, 0.0
      %v1086 = vmax.f32 %v446, 0.0
      %v1087 = vmax.f32 %v448, 0.0
      %v1088 = vmax.f32 %v541, 0.0
      %v1089 = vmax.f32 %v543, 0.0
      %v1090 = vmax.f32 %v636, 0.0
      %v1091 = vmax.f32 %v638, 0.0
      %v1092 = vmax.f32 %v731, 0.0
      %v1093 = vmax.f32 %v733, 0.0
      %v1094 = vmax.f32 %v826, 0.0
      %v1095 = vmax.f32 %v828, 0.0
      %v1096 = vmax.f32 %v921, 0.0
      %v1097 = vmax.f32 %v923, 0.0
      %v1098 = vmax.f32 %v1016, 0.0
      %v1099 = vmax.f32 %v1018, 0.0
      %v1100 = vld [vmem:[%s2] sm:$0xff]
      %v1101 = vld [vmem:[%s2 + $0x8] sm:$0xff]
      %v1102 = vld [vmem:[%s2 + $0x10] sm:$0xff]
      %v1103 = vld [vmem:[%s2 + $0x18] sm:$0xff]
      %v1104 = vld [vmem:[%s2 + $0x20] sm:$0xff]
      %v1105 = vld [vmem:[%s2 + $0x28] sm:$0xff]
      %v1106 = vld [vmem:[%s2 + $0x30] sm:$0xff]
      %v1107 = vld [vmem:[%s2 + $0x38] sm:$0xff]
      %v1108 = vld [vmem:[%s2 + $0x40] sm:$0xff]
      %v1109 = vld [vmem:[%s2 + $0x48] sm:$0xff]
      %v1110 = vld [vmem:[%s2 + $0x50] sm:$0xff]
      %v1111 = vld [vmem:[%s2 + $0x58] sm:$0xff]
      %v1112 = vld [vmem:[%s2 + $0x60] sm:$0xff]
      %v1113 = vld [vmem:[%s2 + $0x68] sm:$0xff]
      %v1114 = vld [vmem:[%s2 + $0x70] sm:$0xff]
      %v1115 = vld [vmem:[%s2 + $0x78] sm:$0xff]
      %v1116 = vld [vmem:[%s2 + $0x80] sm:$0xff]
      %v1117 = vld [vmem:[%s2 + $0x88] sm:$0xff]
      %v1118 = vld [vmem:[%s2 + $0x90] sm:$0xff]
      %v1119 = vld [vmem:[%s2 + $0x98] sm:$0xff]
      %v1120 = vld [vmem:[%s2 + $0xa0] sm:$0xff]
      %v1121 = vld [vmem:[%s2 + $0xa8] sm:$0xff]
      %v1122 = vld [vmem:[%s2 + $0xb0] sm:$0xff]
      %v1123 = vld [vmem:[%s2 + $0xb8] sm:$0xff]
      %v1124 = vld [vmem:[%s2 + $0xc0] sm:$0xff]
      %v1125 = vld [vmem:[%s2 + $0xc8] sm:$0xff]
      %v1126 = vld [vmem:[%s2 + $0xd0] sm:$0xff]
      %v1127 = vld [vmem:[%s2 + $0xd8] sm:$0xff]
      %v1128 = vld [vmem:[%s2 + $0xe0] sm:$0xff]
      %v1129 = vld [vmem:[%s2 + $0xe8] sm:$0xff]
      %v1130 = vld [vmem:[%s2 + $0xf0] sm:$0xff]
      %v1131 = vld [vmem:[%s2 + $0xf8] sm:$0xff]
      %v1132 = vld [vmem:[%s2 + $0x100] sm:$0xff]
      %v1133 = vld [vmem:[%s2 + $0x108] sm:$0xff]
      %v1134 = vld [vmem:[%s2 + $0x110] sm:$0xff]
      %v1135 = vld [vmem:[%s2 + $0x118] sm:$0xff]
      %v1136 = vld [vmem:[%s2 + $0x120] sm:$0xff]
      %v1137 = vld [vmem:[%s2 + $0x128] sm:$0xff]
      %v1138 = vld [vmem:[%s2 + $0x130] sm:$0xff]
      %v1139 = vld [vmem:[%s2 + $0x138] sm:$0xff]
      %v1140 = vld [vmem:[%s2 + $0x140] sm:$0xff]
      %v1141 = vld [vmem:[%s2 + $0x148] sm:$0xff]
      %v1142 = vld [vmem:[%s2 + $0x150] sm:$0xff]
      %v1143 = vld [vmem:[%s2 + $0x158] sm:$0xff]
      %v1144 = vld [vmem:[%s2 + $0x160] sm:$0xff]
      %v1145 = vld [vmem:[%s2 + $0x168] sm:$0xff]
      %v1146 = vld [vmem:[%s2 + $0x170] sm:$0xff]
      %v1147 = vld [vmem:[%s2 + $0x178] sm:$0xff]
      %v1148 = vld [vmem:[%s2 + $0x180] sm:$0xff]
      %v1149 = vld [vmem:[%s2 + $0x188] sm:$0xff]
      %v1150 = vld [vmem:[%s2 + $0x190] sm:$0xff]
      %v1151 = vld [vmem:[%s2 + $0x198] sm:$0xff]
      %v1152 = vld [vmem:[%s2 + $0x1a0] sm:$0xff]
      %v1153 = vld [vmem:[%s2 + $0x1a8] sm:$0xff]
      %v1154 = vld [vmem:[%s2 + $0x1b0] sm:$0xff]
      %v1155 = vld [vmem:[%s2 + $0x1b8] sm:$0xff]
      %v1156 = vld [vmem:[%s2 + $0x1c0] sm:$0xff]
      %v1157 = vld [vmem:[%s2 + $0x1c8] sm:$0xff]
      %v1158 = vld [vmem:[%s2 + $0x1d0] sm:$0xff]
      %v1159 = vld [vmem:[%s2 + $0x1d8] sm:$0xff]
      %v1160 = vld [vmem:[%s2 + $0x1e0] sm:$0xff]
      %v1161 = vld [vmem:[%s2 + $0x1e8] sm:$0xff]
      %v1162 = vld [vmem:[%s2 + $0x1f0] sm:$0xff]
      %v1163 = vld [vmem:[%s2 + $0x1f8] sm:$0xff]
      %v1164 = vld [vmem:[%s2 + $0x200] sm:$0xff]
      %v1165 = vld [vmem:[%s2 + $0x208] sm:$0xff]
      %v1166 = vld [vmem:[%s2 + $0x210] sm:$0xff]
      %v1167 = vld [vmem:[%s2 + $0x218] sm:$0xff]
      %v1168 = vld [vmem:[%s2 + $0x220] sm:$0xff]
      %v1169 = vld [vmem:[%s2 + $0x228] sm:$0xff]
      %v1170 = vld [vmem:[%s2 + $0x230] sm:$0xff]
      %v1171 = vld [vmem:[%s2 + $0x238] sm:$0xff]
      %v1172 = vld [vmem:[%s2 + $0x240] sm:$0xff]
      %v1173 = vld [vmem:[%s2 + $0x248] sm:$0xff]
      %v1174 = vld [vmem:[%s2 + $0x250] sm:$0xff]
      %v1175 = vld [vmem:[%s2 + $0x258] sm:$0xff]
      %v1176 = vld [vmem:[%s2 + $0x260] sm:$0xff]
      %v1177 = vld [vmem:[%s2 + $0x268] sm:$0xff]
      %v1178 = vld [vmem:[%s2 + $0x270] sm:$0xff]
      %v1179 = vld [vmem:[%s2 + $0x278] sm:$0xff]
      %v1180 = vld [vmem:[%s2 + $0x280] sm:$0xff]
      %v1181 = vld [vmem:[%s2 + $0x288] sm:$0xff]
      %v1182 = vld [vmem:[%s2 + $0x290] sm:$0xff]
      %v1183 = vld [vmem:[%s2 + $0x298] sm:$0xff]
      %v1184 = vld [vmem:[%s2 + $0x2a0] sm:$0xff]
      %v1185 = vld [vmem:[%s2 + $0x2a8] sm:$0xff]
      %v1186 = vld [vmem:[%s2 + $0x2b0] sm:$0xff]
      %v1187 = vld [vmem:[%s2 + $0x2b8] sm:$0xff]
      %v1188 = vld [vmem:[%s2 + $0x2c0] sm:$0xff]
      %v1189 = vld [vmem:[%s2 + $0x2c8] sm:$0xff]
      %v1190 = vld [vmem:[%s2 + $0x2d0] sm:$0xff]
      %v1191 = vld [vmem:[%s2 + $0x2d8] sm:$0xff]
      %v1192 = vld [vmem:[%s2 + $0x2e0] sm:$0xff]
      %v1193 = vld [vmem:[%s2 + $0x2e8] sm:$0xff]
      %v1194 = vld [vmem:[%s2 + $0x2f0] sm:$0xff]
      %v1195 = vld [vmem:[%s2 + $0x2f8] sm:$0xff]
      %v1196 = vld [vmem:[%s2 + $0x300] sm:$0xff]
      %v1197 = vld [vmem:[%s2 + $0x308] sm:$0xff]
      %v1198 = vld [vmem:[%s2 + $0x310] sm:$0xff]
      %v1199 = vld [vmem:[%s2 + $0x318] sm:$0xff]
      %v1200 = vld [vmem:[%s2 + $0x320] sm:$0xff]
      %v1201 = vld [vmem:[%s2 + $0x328] sm:$0xff]
      %v1202 = vld [vmem:[%s2 + $0x330] sm:$0xff]
      %v1203 = vld [vmem:[%s2 + $0x338] sm:$0xff]
      %v1204 = vld [vmem:[%s2 + $0x340] sm:$0xff]
      %v1205 = vld [vmem:[%s2 + $0x348] sm:$0xff]
      %v1206 = vld [vmem:[%s2 + $0x350] sm:$0xff]
      %v1207 = vld [vmem:[%s2 + $0x358] sm:$0xff]
      %v1208 = vld [vmem:[%s2 + $0x360] sm:$0xff]
      %v1209 = vld [vmem:[%s2 + $0x368] sm:$0xff]
      %v1210 = vld [vmem:[%s2 + $0x370] sm:$0xff]
      %v1211 = vld [vmem:[%s2 + $0x378] sm:$0xff]
      %v1212 = vld [vmem:[%s2 + $0x380] sm:$0xff]
      %v1213 = vld [vmem:[%s2 + $0x388] sm:$0xff]
      %v1214 = vld [vmem:[%s2 + $0x390] sm:$0xff]
      %v1215 = vld [vmem:[%s2 + $0x398] sm:$0xff]
      %v1216 = vld [vmem:[%s2 + $0x3a0] sm:$0xff]
      %v1217 = vld [vmem:[%s2 + $0x3a8] sm:$0xff]
      %v1218 = vld [vmem:[%s2 + $0x3b0] sm:$0xff]
      %v1219 = vld [vmem:[%s2 + $0x3b8] sm:$0xff]
      %v1220 = vld [vmem:[%s2 + $0x3c0] sm:$0xff]
      %v1221 = vld [vmem:[%s2 + $0x3c8] sm:$0xff]
      %v1222 = vld [vmem:[%s2 + $0x3d0] sm:$0xff]
      %v1223 = vld [vmem:[%s2 + $0x3d8] sm:$0xff]
      %v1224 = vld [vmem:[%s2 + $0x3e0] sm:$0xff]
      %v1225 = vld [vmem:[%s2 + $0x3e8] sm:$0xff]
      %v1226 = vld [vmem:[%s2 + $0x3f0] sm:$0xff]
      %v1227 = vld [vmem:[%s2 + $0x3f8] sm:$0xff]
      %v1228 = vld [vmem:[%s2 + $0x400] sm:$0xff]
      %v1229 = vld [vmem:[%s2 + $0x408] sm:$0xff]
      %v1230 = vld [vmem:[%s2 + $0x410] sm:$0xff]
      %v1231 = vld [vmem:[%s2 + $0x418] sm:$0xff]
      %v1232 = vld [vmem:[%s2 + $0x420] sm:$0xff]
      %v1233 = vld [vmem:[%s2 + $0x428] sm:$0xff]
      %v1234 = vld [vmem:[%s2 + $0x430] sm:$0xff]
      %v1235 = vld [vmem:[%s2 + $0x438] sm:$0xff]
      %v1236 = vld [vmem:[%s2 + $0x440] sm:$0xff]
      %v1237 = vld [vmem:[%s2 + $0x448] sm:$0xff]
      %v1238 = vld [vmem:[%s2 + $0x450] sm:$0xff]
      %v1239 = vld [vmem:[%s2 + $0x458] sm:$0xff]
      %v1240 = vld [vmem:[%s2 + $0x460] sm:$0xff]
      %v1241 = vld [vmem:[%s2 + $0x468] sm:$0xff]
      %v1242 = vld [vmem:[%s2 + $0x470] sm:$0xff]
      %v1243 = vld [vmem:[%s2 + $0x478] sm:$0xff]
      %v1244 = vld [vmem:[%s2 + $0x480] sm:$0xff]
      %v1245 = vld [vmem:[%s2 + $0x488] sm:$0xff]
      %v1246 = vld [vmem:[%s2 + $0x490] sm:$0xff]
      %v1247 = vld [vmem:[%s2 + $0x498] sm:$0xff]
      %v1248 = vld [vmem:[%s2 + $0x4a0] sm:$0xff]
      %v1249 = vld [vmem:[%s2 + $0x4a8] sm:$0xff]
      %v1250 = vld [vmem:[%s2 + $0x4b0] sm:$0xff]
      %v1251 = vld [vmem:[%s2 + $0x4b8] sm:$0xff]
      %v1252 = vld [vmem:[%s2 + $0x4c0] sm:$0xff]
      %v1253 = vld [vmem:[%s2 + $0x4c8] sm:$0xff]
      %v1254 = vld [vmem:[%s2 + $0x4d0] sm:$0xff]
      %v1255 = vld [vmem:[%s2 + $0x4d8] sm:$0xff]
      %v1256 = vld [vmem:[%s2 + $0x4e0] sm:$0xff]
      %v1257 = vld [vmem:[%s2 + $0x4e8] sm:$0xff]
      %v1258 = vld [vmem:[%s2 + $0x4f0] sm:$0xff]
      %v1259 = vld [vmem:[%s2 + $0x4f8] sm:$0xff]
      %v1260 = vld [vmem:[%s2 + $0x500] sm:$0xff]
      %v1261 = vld [vmem:[%s2 + $0x508] sm:$0xff]
      %v1262 = vld [vmem:[%s2 + $0x510] sm:$0xff]
      %v1263 = vld [vmem:[%s2 + $0x518] sm:$0xff]
      %v1264 = vld [vmem:[%s2 + $0x520] sm:$0xff]
      %v1265 = vld [vmem:[%s2 + $0x528] sm:$0xff]
      %v1266 = vld [vmem:[%s2 + $0x530] sm:$0xff]
      %v1267 = vld [vmem:[%s2 + $0x538] sm:$0xff]
      %v1268 = vld [vmem:[%s2 + $0x540] sm:$0xff]
      %v1269 = vld [vmem:[%s2 + $0x548] sm:$0xff]
      %v1270 = vld [vmem:[%s2 + $0x550] sm:$0xff]
      %v1271 = vld [vmem:[%s2 + $0x558] sm:$0xff]
      %v1272 = vld [vmem:[%s2 + $0x560] sm:$0xff]
      %v1273 = vld [vmem:[%s2 + $0x568] sm:$0xff]
      %v1274 = vld [vmem:[%s2 + $0x570] sm:$0xff]
      %v1275 = vld [vmem:[%s2 + $0x578] sm:$0xff]
      %v1276 = vld [vmem:[%s2 + $0x580] sm:$0xff]
      %v1277 = vld [vmem:[%s2 + $0x588] sm:$0xff]
      %v1278 = vld [vmem:[%s2 + $0x590] sm:$0xff]
      %v1279 = vld [vmem:[%s2 + $0x598] sm:$0xff]
      %v1280 = vld [vmem:[%s2 + $0x5a0] sm:$0xff]
      %v1281 = vld [vmem:[%s2 + $0x5a8] sm:$0xff]
      %v1282 = vld [vmem:[%s2 + $0x5b0] sm:$0xff]
      %v1283 = vld [vmem:[%s2 + $0x5b8] sm:$0xff]
      %v1284 = vld [vmem:[%s2 + $0x5c0] sm:$0xff]
      %v1285 = vld [vmem:[%s2 + $0x5c8] sm:$0xff]
      %v1286 = vld [vmem:[%s2 + $0x5d0] sm:$0xff]
      %v1287 = vld [vmem:[%s2 + $0x5d8] sm:$0xff]
      %v1288 = vld [vmem:[%s2 + $0x5e0] sm:$0xff]
      %v1289 = vld [vmem:[%s2 + $0x5e8] sm:$0xff]
      %v1290 = vld [vmem:[%s2 + $0x5f0] sm:$0xff]
      %v1291 = vld [vmem:[%s2 + $0x5f8] sm:$0xff]
      %v1292 = vld [vmem:[%s2 + $0x600] sm:$0xff]
      %v1293 = vld [vmem:[%s2 + $0x608] sm:$0xff]
      %v1294 = vld [vmem:[%s2 + $0x610] sm:$0xff]
      %v1295 = vld [vmem:[%s2 + $0x618] sm:$0xff]
      %v1296 = vld [vmem:[%s2 + $0x620] sm:$0xff]
      %v1297 = vld [vmem:[%s2 + $0x628] sm:$0xff]
      %v1298 = vld [vmem:[%s2 + $0x630] sm:$0xff]
      %v1299 = vld [vmem:[%s2 + $0x638] sm:$0xff]
      %v1300 = vld [vmem:[%s2 + $0x640] sm:$0xff]
      %v1301 = vld [vmem:[%s2 + $0x648] sm:$0xff]
      %v1302 = vld [vmem:[%s2 + $0x650] sm:$0xff]
      %v1303 = vld [vmem:[%s2 + $0x658] sm:$0xff]
      %v1304 = vld [vmem:[%s2 + $0x660] sm:$0xff]
      %v1305 = vld [vmem:[%s2 + $0x668] sm:$0xff]
      %v1306 = vld [vmem:[%s2 + $0x670] sm:$0xff]
      %v1307 = vld [vmem:[%s2 + $0x678] sm:$0xff]
      %v1308 = vld [vmem:[%s2 + $0x680] sm:$0xff]
      %v1309 = vld [vmem:[%s2 + $0x688] sm:$0xff]
      %v1310 = vld [vmem:[%s2 + $0x690] sm:$0xff]
      %v1311 = vld [vmem:[%s2 + $0x698] sm:$0xff]
      %v1312 = vld [vmem:[%s2 + $0x6a0] sm:$0xff]
      %v1313 = vld [vmem:[%s2 + $0x6a8] sm:$0xff]
      %v1314 = vld [vmem:[%s2 + $0x6b0] sm:$0xff]
      %v1315 = vld [vmem:[%s2 + $0x6b8] sm:$0xff]
      %v1316 = vld [vmem:[%s2 + $0x6c0] sm:$0xff]
      %v1317 = vld [vmem:[%s2 + $0x6c8] sm:$0xff]
      %v1318 = vld [vmem:[%s2 + $0x6d0] sm:$0xff]
      %v1319 = vld [vmem:[%s2 + $0x6d8] sm:$0xff]
      %v1320 = vld [vmem:[%s2 + $0x6e0] sm:$0xff]
      %v1321 = vld [vmem:[%s2 + $0x6e8] sm:$0xff]
      %v1322 = vld [vmem:[%s2 + $0x6f0] sm:$0xff]
      %v1323 = vld [vmem:[%s2 + $0x6f8] sm:$0xff]
      %v1324 = vld [vmem:[%s2 + $0x700] sm:$0xff]
      %v1325 = vld [vmem:[%s2 + $0x708] sm:$0xff]
      %v1326 = vld [vmem:[%s2 + $0x710] sm:$0xff]
      %v1327 = vld [vmem:[%s2 + $0x718] sm:$0xff]
      %v1328 = vld [vmem:[%s2 + $0x720] sm:$0xff]
      %v1329 = vld [vmem:[%s2 + $0x728] sm:$0xff]
      %v1330 = vld [vmem:[%s2 + $0x730] sm:$0xff]
      %v1331 = vld [vmem:[%s2 + $0x738] sm:$0xff]
      %v1332 = vld [vmem:[%s2 + $0x740] sm:$0xff]
      %v1333 = vld [vmem:[%s2 + $0x748] sm:$0xff]
      %v1334 = vld [vmem:[%s2 + $0x750] sm:$0xff]
      %v1335 = vld [vmem:[%s2 + $0x758] sm:$0xff]
      %v1336 = vld [vmem:[%s2 + $0x760] sm:$0xff]
      %v1337 = vld [vmem:[%s2 + $0x768] sm:$0xff]
      %v1338 = vld [vmem:[%s2 + $0x770] sm:$0xff]
      %v1339 = vld [vmem:[%s2 + $0x778] sm:$0xff]
      %v1340 = vld [vmem:[%s2 + $0x780] sm:$0xff]
      %v1341 = vld [vmem:[%s2 + $0x788] sm:$0xff]
      %v1342 = vld [vmem:[%s2 + $0x790] sm:$0xff]
      %v1343 = vld [vmem:[%s2 + $0x798] sm:$0xff]
      %v1344 = vld [vmem:[%s2 + $0x7a0] sm:$0xff]
      %v1345 = vld [vmem:[%s2 + $0x7a8] sm:$0xff]
      %v1346 = vld [vmem:[%s2 + $0x7b0] sm:$0xff]
      %v1347 = vld [vmem:[%s2 + $0x7b8] sm:$0xff]
      %v1348 = vld [vmem:[%s2 + $0x7c0] sm:$0xff]
      %v1349 = vld [vmem:[%s2 + $0x7c8] sm:$0xff]
      %v1350 = vld [vmem:[%s2 + $0x7d0] sm:$0xff]
      %v1351 = vld [vmem:[%s2 + $0x7d8] sm:$0xff]
      %v1352 = vld [vmem:[%s2 + $0x7e0] sm:$0xff]
      %v1353 = vld [vmem:[%s2 + $0x7e8] sm:$0xff]
      %v1354 = vld [vmem:[%s2 + $0x7f0] sm:$0xff]
      %v1355 = vld [vmem:[%s2 + $0x7f8] sm:$0xff]
      %1356 = vmatprep.subr.mxu0 0.0
      %1357 = vmatpush1.msra.mxu0 %v1115
      %1358 = vmatprep.subr.mxu0 0.0
      %1359 = vmatpush1.msra.mxu0 %v1114
      %1360 = vmatprep.subr.mxu0 0.0
      %1361 = vmatpush1.msra.mxu0 %v1113
      %1362 = vmatprep.subr.mxu0 0.0
      %1363 = vmatpush1.msra.mxu0 %v1112
      %1364 = vmatprep.subr.mxu0 0.0
      %1365 = vmatpush1.msra.mxu0 %v1111
      %1366 = vmatprep.subr.mxu0 0.0
      %1367 = vmatpush1.msra.mxu0 %v1110
      %1368 = vmatprep.subr.mxu0 0.0
      %1369 = vmatpush1.msra.mxu0 %v1109
      %1370 = vmatprep.subr.mxu0 0.0
      %1371 = vmatpush1.msra.mxu0 %v1108
      %1372 = vmatprep.subr.mxu0 0.0
      %1373 = vmatpush1.msra.mxu0 %v1107
      %1374 = vmatprep.subr.mxu0 0.0
      %1375 = vmatpush1.msra.mxu0 %v1106
      %1376 = vmatprep.subr.mxu0 0.0
      %1377 = vmatpush1.msra.mxu0 %v1105
      %1378 = vmatprep.subr.mxu0 0.0
      %1379 = vmatpush1.msra.mxu0 %v1104
      %1380 = vmatprep.subr.mxu0 0.0
      %1381 = vmatpush1.msra.mxu0 %v1103
      %1382 = vmatprep.subr.mxu0 0.0
      %1383 = vmatpush1.msra.mxu0 %v1102
      %1384 = vmatprep.subr.mxu0 0.0
      %1385 = vmatpush1.msra.mxu0 %v1101
      %1386 = vmatprep.subr.mxu0 0.0
      %1387 = vmatpush1.msra.mxu0 %v1100
      %1388 = vmatprep.subr.mxu0 0.0
      %1389 = vmatpush2.msra.mxu0 %v1131
      %1390 = vmatprep.subr.mxu0 0.0
      %1391 = vmatpush2.msra.mxu0 %v1130
      %1392 = vmatprep.subr.mxu0 0.0
      %1393 = vmatpush2.msra.mxu0 %v1129
      %1394 = vmatprep.subr.mxu0 0.0
      %1395 = vmatpush2.msra.mxu0 %v1128
      %1396 = vmatprep.subr.mxu0 0.0
      %1397 = vmatpush2.msra.mxu0 %v1127
      %1398 = vmatprep.subr.mxu0 0.0
      %1399 = vmatpush2.msra.mxu0 %v1126
      %1400 = vmatprep.subr.mxu0 0.0
      %1401 = vmatpush2.msra.mxu0 %v1125
      %1402 = vmatprep.subr.mxu0 0.0
      %1403 = vmatpush2.msra.mxu0 %v1124
      %1404 = vmatprep.subr.mxu0 0.0
      %1405 = vmatpush2.msra.mxu0 %v1123
      %1406 = vmatprep.subr.mxu0 0.0
      %1407 = vmatpush2.msra.mxu0 %v1122
      %1408 = vmatprep.subr.mxu0 0.0
      %1409 = vmatpush2.msra.mxu0 %v1121
      %1410 = vmatprep.subr.mxu0 0.0
      %1411 = vmatpush2.msra.mxu0 %v1120
      %1412 = vmatprep.subr.mxu0 0.0
      %1413 = vmatpush2.msra.mxu0 %v1119
      %1414 = vmatprep.subr.mxu0 0.0
      %1415 = vmatpush2.msra.mxu0 %v1118
      %1416 = vmatprep.subr.mxu0 0.0
      %1417 = vmatpush2.msra.mxu0 %v1117
      %1418 = vmatprep.subr.mxu0 0.0
      %1419 = vmatpush2.msra.mxu0 %v1116
      %1420 = vmatprep.mubr.f32.mxu0 %v1021
      %1421 = vmatmul.mubr.f32.gmra.mxu0 %v1020
      %v1422 = vpop.f32.mrf.mxu0
      %v1423 = vadd.f32 %v174, %v1422
      %v1424 = vpop.f32.mrf.mxu0
      %1425 = vmatprep.mubr.f32.mxu0 %v1037
      %1426 = vmatmul.mubr.f32.gmra.mxu0 %v1036
      %v1427 = vpop.f32.mrf.mxu0
      %v1428 = vadd.f32 %v175, %v1427
      %v1429 = vpop.f32.mrf.mxu0
      %1430 = vmatprep.mubr.f32.mxu0 %v1053
      %1431 = vmatmul.mubr.f32.gmra.mxu0 %v1052
      %v1432 = vpop.f32.mrf.mxu0
      %v1433 = vadd.f32 %v176, %v1432
      %v1434 = vpop.f32.mrf.mxu0
      %1435 = vmatprep.mubr.f32.mxu0 %v1069
      %1436 = vmatmul.mubr.f32.gmra.mxu0 %v1068
      %v1437 = vpop.f32.mrf.mxu0
      %v1438 = vadd.f32 %v177, %v1437
      %v1439 = vpop.f32.mrf.mxu0
      %1440 = vmatprep.mubr.f32.mxu0 %v1085
      %1441 = vmatmul.mubr.f32.gmra.mxu0 %v1084
      %v1442 = vpop.f32.mrf.mxu0
      %v1443 = vadd.f32 %v178, %v1442
      %v1444 = vpop.f32.mrf.mxu0
      %1445 = vdwg.mxu0
      %1446 = vmatprep.subr.mxu0 0.0
      %1447 = vmatpush1.msra.mxu0 %v1147
      %1448 = vmatprep.subr.mxu0 0.0
      %1449 = vmatpush1.msra.mxu0 %v1146
      %1450 = vmatprep.subr.mxu0 0.0
      %1451 = vmatpush1.msra.mxu0 %v1145
      %1452 = vmatprep.subr.mxu0 0.0
      %1453 = vmatpush1.msra.mxu0 %v1144
      %1454 = vmatprep.subr.mxu0 0.0
      %1455 = vmatpush1.msra.mxu0 %v1143
      %1456 = vmatprep.subr.mxu0 0.0
      %1457 = vmatpush1.msra.mxu0 %v1142
      %1458 = vmatprep.subr.mxu0 0.0
      %1459 = vmatpush1.msra.mxu0 %v1141
      %1460 = vmatprep.subr.mxu0 0.0
      %1461 = vmatpush1.msra.mxu0 %v1140
      %1462 = vmatprep.subr.mxu0 0.0
      %1463 = vmatpush1.msra.mxu0 %v1139
      %1464 = vmatprep.subr.mxu0 0.0
      %1465 = vmatpush1.msra.mxu0 %v1138
      %1466 = vmatprep.subr.mxu0 0.0
      %1467 = vmatpush1.msra.mxu0 %v1137
      %1468 = vmatprep.subr.mxu0 0.0
      %1469 = vmatpush1.msra.mxu0 %v1136
      %1470 = vmatprep.subr.mxu0 0.0
      %1471 = vmatpush1.msra.mxu0 %v1135
      %1472 = vmatprep.subr.mxu0 0.0
      %1473 = vmatpush1.msra.mxu0 %v1134
      %1474 = vmatprep.subr.mxu0 0.0
      %1475 = vmatpush1.msra.mxu0 %v1133
      %1476 = vmatprep.subr.mxu0 0.0
      %1477 = vmatpush1.msra.mxu0 %v1132
      %1478 = vmatprep.subr.mxu0 0.0
      %1479 = vmatpush2.msra.mxu0 %v1163
      %1480 = vmatprep.subr.mxu0 0.0
      %1481 = vmatpush2.msra.mxu0 %v1162
      %1482 = vmatprep.subr.mxu0 0.0
      %1483 = vmatpush2.msra.mxu0 %v1161
      %1484 = vmatprep.subr.mxu0 0.0
      %1485 = vmatpush2.msra.mxu0 %v1160
      %1486 = vmatprep.subr.mxu0 0.0
      %1487 = vmatpush2.msra.mxu0 %v1159
      %1488 = vmatprep.subr.mxu0 0.0
      %1489 = vmatpush2.msra.mxu0 %v1158
      %1490 = vmatprep.subr.mxu0 0.0
      %1491 = vmatpush2.msra.mxu0 %v1157
      %1492 = vmatprep.subr.mxu0 0.0
      %1493 = vmatpush2.msra.mxu0 %v1156
      %1494 = vmatprep.subr.mxu0 0.0
      %1495 = vmatpush2.msra.mxu0 %v1155
      %1496 = vmatprep.subr.mxu0 0.0
      %1497 = vmatpush2.msra.mxu0 %v1154
      %1498 = vmatprep.subr.mxu0 0.0
      %1499 = vmatpush2.msra.mxu0 %v1153
      %1500 = vmatprep.subr.mxu0 0.0
      %1501 = vmatpush2.msra.mxu0 %v1152
      %1502 = vmatprep.subr.mxu0 0.0
      %1503 = vmatpush2.msra.mxu0 %v1151
      %1504 = vmatprep.subr.mxu0 0.0
      %1505 = vmatpush2.msra.mxu0 %v1150
      %1506 = vmatprep.subr.mxu0 0.0
      %1507 = vmatpush2.msra.mxu0 %v1149
      %1508 = vmatprep.subr.mxu0 0.0
      %1509 = vmatpush2.msra.mxu0 %v1148
      %1510 = vmatprep.mubr.f32.mxu0 %v1023
      %1511 = vmatmul.mubr.f32.gmra.mxu0 %v1022
      %v1512 = vpop.f32.mrf.mxu0
      %v1513 = vadd.f32 %v1423, %v1512
      %v1514 = vpop.f32.mrf.mxu0
      %1515 = vmatprep.mubr.f32.mxu0 %v1039
      %1516 = vmatmul.mubr.f32.gmra.mxu0 %v1038
      %v1517 = vpop.f32.mrf.mxu0
      %v1518 = vadd.f32 %v1428, %v1517
      %v1519 = vpop.f32.mrf.mxu0
      %1520 = vmatprep.mubr.f32.mxu0 %v1055
      %1521 = vmatmul.mubr.f32.gmra.mxu0 %v1054
      %v1522 = vpop.f32.mrf.mxu0
      %v1523 = vadd.f32 %v1433, %v1522
      %v1524 = vpop.f32.mrf.mxu0
      %1525 = vmatprep.mubr.f32.mxu0 %v1071
      %1526 = vmatmul.mubr.f32.gmra.mxu0 %v1070
      %v1527 = vpop.f32.mrf.mxu0
      %v1528 = vadd.f32 %v1438, %v1527
      %v1529 = vpop.f32.mrf.mxu0
      %1530 = vmatprep.mubr.f32.mxu0 %v1087
      %1531 = vmatmul.mubr.f32.gmra.mxu0 %v1086
      %v1532 = vpop.f32.mrf.mxu0
      %v1533 = vadd.f32 %v1443, %v1532
      %v1534 = vpop.f32.mrf.mxu0
      %1535 = vdwg.mxu0
      %1536 = vmatprep.subr.mxu0 0.0
      %1537 = vmatpush1.msra.mxu0 %v1179
      %1538 = vmatprep.subr.mxu0 0.0
      %1539 = vmatpush1.msra.mxu0 %v1178
      %1540 = vmatprep.subr.mxu0 0.0
      %1541 = vmatpush1.msra.mxu0 %v1177
      %1542 = vmatprep.subr.mxu0 0.0
      %1543 = vmatpush1.msra.mxu0 %v1176
      %1544 = vmatprep.subr.mxu0 0.0
      %1545 = vmatpush1.msra.mxu0 %v1175
      %1546 = vmatprep.subr.mxu0 0.0
      %1547 = vmatpush1.msra.mxu0 %v1174
      %1548 = vmatprep.subr.mxu0 0.0
      %1549 = vmatpush1.msra.mxu0 %v1173
      %1550 = vmatprep.subr.mxu0 0.0
      %1551 = vmatpush1.msra.mxu0 %v1172
      %1552 = vmatprep.subr.mxu0 0.0
      %1553 = vmatpush1.msra.mxu0 %v1171
      %1554 = vmatprep.subr.mxu0 0.0
      %1555 = vmatpush1.msra.mxu0 %v1170
      %1556 = vmatprep.subr.mxu0 0.0
      %1557 = vmatpush1.msra.mxu0 %v1169
      %1558 = vmatprep.subr.mxu0 0.0
      %1559 = vmatpush1.msra.mxu0 %v1168
      %1560 = vmatprep.subr.mxu0 0.0
      %1561 = vmatpush1.msra.mxu0 %v1167
      %1562 = vmatprep.subr.mxu0 0.0
      %1563 = vmatpush1.msra.mxu0 %v1166
      %1564 = vmatprep.subr.mxu0 0.0
      %1565 = vmatpush1.msra.mxu0 %v1165
      %1566 = vmatprep.subr.mxu0 0.0
      %1567 = vmatpush1.msra.mxu0 %v1164
      %1568 = vmatprep.subr.mxu0 0.0
      %1569 = vmatpush2.msra.mxu0 %v1195
      %1570 = vmatprep.subr.mxu0 0.0
      %1571 = vmatpush2.msra.mxu0 %v1194
      %1572 = vmatprep.subr.mxu0 0.0
      %1573 = vmatpush2.msra.mxu0 %v1193
      %1574 = vmatprep.subr.mxu0 0.0
      %1575 = vmatpush2.msra.mxu0 %v1192
      %1576 = vmatprep.subr.mxu0 0.0
      %1577 = vmatpush2.msra.mxu0 %v1191
      %1578 = vmatprep.subr.mxu0 0.0
      %1579 = vmatpush2.msra.mxu0 %v1190
      %1580 = vmatprep.subr.mxu0 0.0
      %1581 = vmatpush2.msra.mxu0 %v1189
      %1582 = vmatprep.subr.mxu0 0.0
      %1583 = vmatpush2.msra.mxu0 %v1188
      %1584 = vmatprep.subr.mxu0 0.0
      %1585 = vmatpush2.msra.mxu0 %v1187
      %1586 = vmatprep.subr.mxu0 0.0
      %1587 = vmatpush2.msra.mxu0 %v1186
      %1588 = vmatprep.subr.mxu0 0.0
      %1589 = vmatpush2.msra.mxu0 %v1185
      %1590 = vmatprep.subr.mxu0 0.0
      %1591 = vmatpush2.msra.mxu0 %v1184
      %1592 = vmatprep.subr.mxu0 0.0
      %1593 = vmatpush2.msra.mxu0 %v1183
      %1594 = vmatprep.subr.mxu0 0.0
      %1595 = vmatpush2.msra.mxu0 %v1182
      %1596 = vmatprep.subr.mxu0 0.0
      %1597 = vmatpush2.msra.mxu0 %v1181
      %1598 = vmatprep.subr.mxu0 0.0
      %1599 = vmatpush2.msra.mxu0 %v1180
      %1600 = vmatprep.mubr.f32.mxu0 %v1025
      %1601 = vmatmul.mubr.f32.gmra.mxu0 %v1024
      %v1602 = vpop.f32.mrf.mxu0
      %v1603 = vadd.f32 %v1513, %v1602
      %v1604 = vpop.f32.mrf.mxu0
      %1605 = vmatprep.mubr.f32.mxu0 %v1041
      %1606 = vmatmul.mubr.f32.gmra.mxu0 %v1040
      %v1607 = vpop.f32.mrf.mxu0
      %v1608 = vadd.f32 %v1518, %v1607
      %v1609 = vpop.f32.mrf.mxu0
      %1610 = vmatprep.mubr.f32.mxu0 %v1057
      %1611 = vmatmul.mubr.f32.gmra.mxu0 %v1056
      %v1612 = vpop.f32.mrf.mxu0
      %v1613 = vadd.f32 %v1523, %v1612
      %v1614 = vpop.f32.mrf.mxu0
      %1615 = vmatprep.mubr.f32.mxu0 %v1073
      %1616 = vmatmul.mubr.f32.gmra.mxu0 %v1072
      %v1617 = vpop.f32.mrf.mxu0
      %v1618 = vadd.f32 %v1528, %v1617
      %v1619 = vpop.f32.mrf.mxu0
      %1620 = vmatprep.mubr.f32.mxu0 %v1089
      %1621 = vmatmul.mubr.f32.gmra.mxu0 %v1088
      %v1622 = vpop.f32.mrf.mxu0
      %v1623 = vadd.f32 %v1533, %v1622
      %v1624 = vpop.f32.mrf.mxu0
      %1625 = vdwg.mxu0
      %1626 = vmatprep.subr.mxu0 0.0
      %1627 = vmatpush1.msra.mxu0 %v1211
      %1628 = vmatprep.subr.mxu0 0.0
      %1629 = vmatpush1.msra.mxu0 %v1210
      %1630 = vmatprep.subr.mxu0 0.0
      %1631 = vmatpush1.msra.mxu0 %v1209
      %1632 = vmatprep.subr.mxu0 0.0
      %1633 = vmatpush1.msra.mxu0 %v1208
      %1634 = vmatprep.subr.mxu0 0.0
      %1635 = vmatpush1.msra.mxu0 %v1207
      %1636 = vmatprep.subr.mxu0 0.0
      %1637 = vmatpush1.msra.mxu0 %v1206
      %1638 = vmatprep.subr.mxu0 0.0
      %1639 = vmatpush1.msra.mxu0 %v1205
      %1640 = vmatprep.subr.mxu0 0.0
      %1641 = vmatpush1.msra.mxu0 %v1204
      %1642 = vmatprep.subr.mxu0 0.0
      %1643 = vmatpush1.msra.mxu0 %v1203
      %1644 = vmatprep.subr.mxu0 0.0
      %1645 = vmatpush1.msra.mxu0 %v1202
      %1646 = vmatprep.subr.mxu0 0.0
      %1647 = vmatpush1.msra.mxu0 %v1201
      %1648 = vmatprep.subr.mxu0 0.0
      %1649 = vmatpush1.msra.mxu0 %v1200
      %1650 = vmatprep.subr.mxu0 0.0
      %1651 = vmatpush1.msra.mxu0 %v1199
      %1652 = vmatprep.subr.mxu0 0.0
      %1653 = vmatpush1.msra.mxu0 %v1198
      %1654 = vmatprep.subr.mxu0 0.0
      %1655 = vmatpush1.msra.mxu0 %v1197
      %1656 = vmatprep.subr.mxu0 0.0
      %1657 = vmatpush1.msra.mxu0 %v1196
      %1658 = vmatprep.subr.mxu0 0.0
      %1659 = vmatpush2.msra.mxu0 %v1227
      %1660 = vmatprep.subr.mxu0 0.0
      %1661 = vmatpush2.msra.mxu0 %v1226
      %1662 = vmatprep.subr.mxu0 0.0
      %1663 = vmatpush2.msra.mxu0 %v1225
      %1664 = vmatprep.subr.mxu0 0.0
      %1665 = vmatpush2.msra.mxu0 %v1224
      %1666 = vmatprep.subr.mxu0 0.0
      %1667 = vmatpush2.msra.mxu0 %v1223
      %1668 = vmatprep.subr.mxu0 0.0
      %1669 = vmatpush2.msra.mxu0 %v1222
      %1670 = vmatprep.subr.mxu0 0.0
      %1671 = vmatpush2.msra.mxu0 %v1221
      %1672 = vmatprep.subr.mxu0 0.0
      %1673 = vmatpush2.msra.mxu0 %v1220
      %1674 = vmatprep.subr.mxu0 0.0
      %1675 = vmatpush2.msra.mxu0 %v1219
      %1676 = vmatprep.subr.mxu0 0.0
      %1677 = vmatpush2.msra.mxu0 %v1218
      %1678 = vmatprep.subr.mxu0 0.0
      %1679 = vmatpush2.msra.mxu0 %v1217
      %1680 = vmatprep.subr.mxu0 0.0
      %1681 = vmatpush2.msra.mxu0 %v1216
      %1682 = vmatprep.subr.mxu0 0.0
      %1683 = vmatpush2.msra.mxu0 %v1215
      %1684 = vmatprep.subr.mxu0 0.0
      %1685 = vmatpush2.msra.mxu0 %v1214
      %1686 = vmatprep.subr.mxu0 0.0
      %1687 = vmatpush2.msra.mxu0 %v1213
      %1688 = vmatprep.subr.mxu0 0.0
      %1689 = vmatpush2.msra.mxu0 %v1212
      %1690 = vmatprep.mubr.f32.mxu0 %v1027
      %1691 = vmatmul.mubr.f32.gmra.mxu0 %v1026
      %v1692 = vpop.f32.mrf.mxu0
      %v1693 = vadd.f32 %v1603, %v1692
      %v1694 = vpop.f32.mrf.mxu0
      %1695 = vmatprep.mubr.f32.mxu0 %v1043
      %1696 = vmatmul.mubr.f32.gmra.mxu0 %v1042
      %v1697 = vpop.f32.mrf.mxu0
      %v1698 = vadd.f32 %v1608, %v1697
      %v1699 = vpop.f32.mrf.mxu0
      %1700 = vmatprep.mubr.f32.mxu0 %v1059
      %1701 = vmatmul.mubr.f32.gmra.mxu0 %v1058
      %v1702 = vpop.f32.mrf.mxu0
      %v1703 = vadd.f32 %v1613, %v1702
      %v1704 = vpop.f32.mrf.mxu0
      %1705 = vmatprep.mubr.f32.mxu0 %v1075
      %1706 = vmatmul.mubr.f32.gmra.mxu0 %v1074
      %v1707 = vpop.f32.mrf.mxu0
      %v1708 = vadd.f32 %v1618, %v1707
      %v1709 = vpop.f32.mrf.mxu0
      %1710 = vmatprep.mubr.f32.mxu0 %v1091
      %1711 = vmatmul.mubr.f32.gmra.mxu0 %v1090
      %v1712 = vpop.f32.mrf.mxu0
      %v1713 = vadd.f32 %v1623, %v1712
      %v1714 = vpop.f32.mrf.mxu0
      %1715 = vdwg.mxu0
      %1716 = vmatprep.subr.mxu0 0.0
      %1717 = vmatpush1.msra.mxu0 %v1243
      %1718 = vmatprep.subr.mxu0 0.0
      %1719 = vmatpush1.msra.mxu0 %v1242
      %1720 = vmatprep.subr.mxu0 0.0
      %1721 = vmatpush1.msra.mxu0 %v1241
      %1722 = vmatprep.subr.mxu0 0.0
      %1723 = vmatpush1.msra.mxu0 %v1240
      %1724 = vmatprep.subr.mxu0 0.0
      %1725 = vmatpush1.msra.mxu0 %v1239
      %1726 = vmatprep.subr.mxu0 0.0
      %1727 = vmatpush1.msra.mxu0 %v1238
      %1728 = vmatprep.subr.mxu0 0.0
      %1729 = vmatpush1.msra.mxu0 %v1237
      %1730 = vmatprep.subr.mxu0 0.0
      %1731 = vmatpush1.msra.mxu0 %v1236
      %1732 = vmatprep.subr.mxu0 0.0
      %1733 = vmatpush1.msra.mxu0 %v1235
      %1734 = vmatprep.subr.mxu0 0.0
      %1735 = vmatpush1.msra.mxu0 %v1234
      %1736 = vmatprep.subr.mxu0 0.0
      %1737 = vmatpush1.msra.mxu0 %v1233
      %1738 = vmatprep.subr.mxu0 0.0
      %1739 = vmatpush1.msra.mxu0 %v1232
      %1740 = vmatprep.subr.mxu0 0.0
      %1741 = vmatpush1.msra.mxu0 %v1231
      %1742 = vmatprep.subr.mxu0 0.0
      %1743 = vmatpush1.msra.mxu0 %v1230
      %1744 = vmatprep.subr.mxu0 0.0
      %1745 = vmatpush1.msra.mxu0 %v1229
      %1746 = vmatprep.subr.mxu0 0.0
      %1747 = vmatpush1.msra.mxu0 %v1228
      %1748 = vmatprep.subr.mxu0 0.0
      %1749 = vmatpush2.msra.mxu0 %v1259
      %1750 = vmatprep.subr.mxu0 0.0
      %1751 = vmatpush2.msra.mxu0 %v1258
      %1752 = vmatprep.subr.mxu0 0.0
      %1753 = vmatpush2.msra.mxu0 %v1257
      %1754 = vmatprep.subr.mxu0 0.0
      %1755 = vmatpush2.msra.mxu0 %v1256
      %1756 = vmatprep.subr.mxu0 0.0
      %1757 = vmatpush2.msra.mxu0 %v1255
      %1758 = vmatprep.subr.mxu0 0.0
      %1759 = vmatpush2.msra.mxu0 %v1254
      %1760 = vmatprep.subr.mxu0 0.0
      %1761 = vmatpush2.msra.mxu0 %v1253
      %1762 = vmatprep.subr.mxu0 0.0
      %1763 = vmatpush2.msra.mxu0 %v1252
      %1764 = vmatprep.subr.mxu0 0.0
      %1765 = vmatpush2.msra.mxu0 %v1251
      %1766 = vmatprep.subr.mxu0 0.0
      %1767 = vmatpush2.msra.mxu0 %v1250
      %1768 = vmatprep.subr.mxu0 0.0
      %1769 = vmatpush2.msra.mxu0 %v1249
      %1770 = vmatprep.subr.mxu0 0.0
      %1771 = vmatpush2.msra.mxu0 %v1248
      %1772 = vmatprep.subr.mxu0 0.0
      %1773 = vmatpush2.msra.mxu0 %v1247
      %1774 = vmatprep.subr.mxu0 0.0
      %1775 = vmatpush2.msra.mxu0 %v1246
      %1776 = vmatprep.subr.mxu0 0.0
      %1777 = vmatpush2.msra.mxu0 %v1245
      %1778 = vmatprep.subr.mxu0 0.0
      %1779 = vmatpush2.msra.mxu0 %v1244
      %1780 = vmatprep.mubr.f32.mxu0 %v1029
      %1781 = vmatmul.mubr.f32.gmra.mxu0 %v1028
      %v1782 = vpop.f32.mrf.mxu0
      %v1783 = vadd.f32 %v1693, %v1782
      %v1784 = vpop.f32.mrf.mxu0
      %1785 = vmatprep.mubr.f32.mxu0 %v1045
      %1786 = vmatmul.mubr.f32.gmra.mxu0 %v1044
      %v1787 = vpop.f32.mrf.mxu0
      %v1788 = vadd.f32 %v1698, %v1787
      %v1789 = vpop.f32.mrf.mxu0
      %1790 = vmatprep.mubr.f32.mxu0 %v1061
      %1791 = vmatmul.mubr.f32.gmra.mxu0 %v1060
      %v1792 = vpop.f32.mrf.mxu0
      %v1793 = vadd.f32 %v1703, %v1792
      %v1794 = vpop.f32.mrf.mxu0
      %1795 = vmatprep.mubr.f32.mxu0 %v1077
      %1796 = vmatmul.mubr.f32.gmra.mxu0 %v1076
      %v1797 = vpop.f32.mrf.mxu0
      %v1798 = vadd.f32 %v1708, %v1797
      %v1799 = vpop.f32.mrf.mxu0
      %1800 = vmatprep.mubr.f32.mxu0 %v1093
      %1801 = vmatmul.mubr.f32.gmra.mxu0 %v1092
      %v1802 = vpop.f32.mrf.mxu0
      %v1803 = vadd.f32 %v1713, %v1802
      %v1804 = vpop.f32.mrf.mxu0
      %1805 = vdwg.mxu0
      %1806 = vmatprep.subr.mxu0 0.0
      %1807 = vmatpush1.msra.mxu0 %v1275
      %1808 = vmatprep.subr.mxu0 0.0
      %1809 = vmatpush1.msra.mxu0 %v1274
      %1810 = vmatprep.subr.mxu0 0.0
      %1811 = vmatpush1.msra.mxu0 %v1273
      %1812 = vmatprep.subr.mxu0 0.0
      %1813 = vmatpush1.msra.mxu0 %v1272
      %1814 = vmatprep.subr.mxu0 0.0
      %1815 = vmatpush1.msra.mxu0 %v1271
      %1816 = vmatprep.subr.mxu0 0.0
      %1817 = vmatpush1.msra.mxu0 %v1270
      %1818 = vmatprep.subr.mxu0 0.0
      %1819 = vmatpush1.msra.mxu0 %v1269
      %1820 = vmatprep.subr.mxu0 0.0
      %1821 = vmatpush1.msra.mxu0 %v1268
      %1822 = vmatprep.subr.mxu0 0.0
      %1823 = vmatpush1.msra.mxu0 %v1267
      %1824 = vmatprep.subr.mxu0 0.0
      %1825 = vmatpush1.msra.mxu0 %v1266
      %1826 = vmatprep.subr.mxu0 0.0
      %1827 = vmatpush1.msra.mxu0 %v1265
      %1828 = vmatprep.subr.mxu0 0.0
      %1829 = vmatpush1.msra.mxu0 %v1264
      %1830 = vmatprep.subr.mxu0 0.0
      %1831 = vmatpush1.msra.mxu0 %v1263
      %1832 = vmatprep.subr.mxu0 0.0
      %1833 = vmatpush1.msra.mxu0 %v1262
      %1834 = vmatprep.subr.mxu0 0.0
      %1835 = vmatpush1.msra.mxu0 %v1261
      %1836 = vmatprep.subr.mxu0 0.0
      %1837 = vmatpush1.msra.mxu0 %v1260
      %1838 = vmatprep.subr.mxu0 0.0
      %1839 = vmatpush2.msra.mxu0 %v1291
      %1840 = vmatprep.subr.mxu0 0.0
      %1841 = vmatpush2.msra.mxu0 %v1290
      %1842 = vmatprep.subr.mxu0 0.0
      %1843 = vmatpush2.msra.mxu0 %v1289
      %1844 = vmatprep.subr.mxu0 0.0
      %1845 = vmatpush2.msra.mxu0 %v1288
      %1846 = vmatprep.subr.mxu0 0.0
      %1847 = vmatpush2.msra.mxu0 %v1287
      %1848 = vmatprep.subr.mxu0 0.0
      %1849 = vmatpush2.msra.mxu0 %v1286
      %1850 = vmatprep.subr.mxu0 0.0
      %1851 = vmatpush2.msra.mxu0 %v1285
      %1852 = vmatprep.subr.mxu0 0.0
      %1853 = vmatpush2.msra.mxu0 %v1284
      %1854 = vmatprep.subr.mxu0 0.0
      %1855 = vmatpush2.msra.mxu0 %v1283
      %1856 = vmatprep.subr.mxu0 0.0
      %1857 = vmatpush2.msra.mxu0 %v1282
      %1858 = vmatprep.subr.mxu0 0.0
      %1859 = vmatpush2.msra.mxu0 %v1281
      %1860 = vmatprep.subr.mxu0 0.0
      %1861 = vmatpush2.msra.mxu0 %v1280
      %1862 = vmatprep.subr.mxu0 0.0
      %1863 = vmatpush2.msra.mxu0 %v1279
      %1864 = vmatprep.subr.mxu0 0.0
      %1865 = vmatpush2.msra.mxu0 %v1278
      %1866 = vmatprep.subr.mxu0 0.0
      %1867 = vmatpush2.msra.mxu0 %v1277
      %1868 = vmatprep.subr.mxu0 0.0
      %1869 = vmatpush2.msra.mxu0 %v1276
      %1870 = vmatprep.mubr.f32.mxu0 %v1031
      %1871 = vmatmul.mubr.f32.gmra.mxu0 %v1030
      %v1872 = vpop.f32.mrf.mxu0
      %v1873 = vadd.f32 %v1783, %v1872
      %v1874 = vpop.f32.mrf.mxu0
      %1875 = vmatprep.mubr.f32.mxu0 %v1047
      %1876 = vmatmul.mubr.f32.gmra.mxu0 %v1046
      %v1877 = vpop.f32.mrf.mxu0
      %v1878 = vadd.f32 %v1788, %v1877
      %v1879 = vpop.f32.mrf.mxu0
      %1880 = vmatprep.mubr.f32.mxu0 %v1063
      %1881 = vmatmul.mubr.f32.gmra.mxu0 %v1062
      %v1882 = vpop.f32.mrf.mxu0
      %v1883 = vadd.f32 %v1793, %v1882
      %v1884 = vpop.f32.mrf.mxu0
      %1885 = vmatprep.mubr.f32.mxu0 %v1079
      %1886 = vmatmul.mubr.f32.gmra.mxu0 %v1078
      %v1887 = vpop.f32.mrf.mxu0
      %v1888 = vadd.f32 %v1798, %v1887
      %v1889 = vpop.f32.mrf.mxu0
      %1890 = vmatprep.mubr.f32.mxu0 %v1095
      %1891 = vmatmul.mubr.f32.gmra.mxu0 %v1094
      %v1892 = vpop.f32.mrf.mxu0
      %v1893 = vadd.f32 %v1803, %v1892
      %v1894 = vpop.f32.mrf.mxu0
      %1895 = vdwg.mxu0
      %1896 = vmatprep.subr.mxu0 0.0
      %1897 = vmatpush1.msra.mxu0 %v1307
      %1898 = vmatprep.subr.mxu0 0.0
      %1899 = vmatpush1.msra.mxu0 %v1306
      %1900 = vmatprep.subr.mxu0 0.0
      %1901 = vmatpush1.msra.mxu0 %v1305
      %1902 = vmatprep.subr.mxu0 0.0
      %1903 = vmatpush1.msra.mxu0 %v1304
      %1904 = vmatprep.subr.mxu0 0.0
      %1905 = vmatpush1.msra.mxu0 %v1303
      %1906 = vmatprep.subr.mxu0 0.0
      %1907 = vmatpush1.msra.mxu0 %v1302
      %1908 = vmatprep.subr.mxu0 0.0
      %1909 = vmatpush1.msra.mxu0 %v1301
      %1910 = vmatprep.subr.mxu0 0.0
      %1911 = vmatpush1.msra.mxu0 %v1300
      %1912 = vmatprep.subr.mxu0 0.0
      %1913 = vmatpush1.msra.mxu0 %v1299
      %1914 = vmatprep.subr.mxu0 0.0
      %1915 = vmatpush1.msra.mxu0 %v1298
      %1916 = vmatprep.subr.mxu0 0.0
      %1917 = vmatpush1.msra.mxu0 %v1297
      %1918 = vmatprep.subr.mxu0 0.0
      %1919 = vmatpush1.msra.mxu0 %v1296
      %1920 = vmatprep.subr.mxu0 0.0
      %1921 = vmatpush1.msra.mxu0 %v1295
      %1922 = vmatprep.subr.mxu0 0.0
      %1923 = vmatpush1.msra.mxu0 %v1294
      %1924 = vmatprep.subr.mxu0 0.0
      %1925 = vmatpush1.msra.mxu0 %v1293
      %1926 = vmatprep.subr.mxu0 0.0
      %1927 = vmatpush1.msra.mxu0 %v1292
      %1928 = vmatprep.subr.mxu0 0.0
      %1929 = vmatpush2.msra.mxu0 %v1323
      %1930 = vmatprep.subr.mxu0 0.0
      %1931 = vmatpush2.msra.mxu0 %v1322
      %1932 = vmatprep.subr.mxu0 0.0
      %1933 = vmatpush2.msra.mxu0 %v1321
      %1934 = vmatprep.subr.mxu0 0.0
      %1935 = vmatpush2.msra.mxu0 %v1320
      %1936 = vmatprep.subr.mxu0 0.0
      %1937 = vmatpush2.msra.mxu0 %v1319
      %1938 = vmatprep.subr.mxu0 0.0
      %1939 = vmatpush2.msra.mxu0 %v1318
      %1940 = vmatprep.subr.mxu0 0.0
      %1941 = vmatpush2.msra.mxu0 %v1317
      %1942 = vmatprep.subr.mxu0 0.0
      %1943 = vmatpush2.msra.mxu0 %v1316
      %1944 = vmatprep.subr.mxu0 0.0
      %1945 = vmatpush2.msra.mxu0 %v1315
      %1946 = vmatprep.subr.mxu0 0.0
      %1947 = vmatpush2.msra.mxu0 %v1314
      %1948 = vmatprep.subr.mxu0 0.0
      %1949 = vmatpush2.msra.mxu0 %v1313
      %1950 = vmatprep.subr.mxu0 0.0
      %1951 = vmatpush2.msra.mxu0 %v1312
      %1952 = vmatprep.subr.mxu0 0.0
      %1953 = vmatpush2.msra.mxu0 %v1311
      %1954 = vmatprep.subr.mxu0 0.0
      %1955 = vmatpush2.msra.mxu0 %v1310
      %1956 = vmatprep.subr.mxu0 0.0
      %1957 = vmatpush2.msra.mxu0 %v1309
      %1958 = vmatprep.subr.mxu0 0.0
      %1959 = vmatpush2.msra.mxu0 %v1308
      %1960 = vmatprep.mubr.f32.mxu0 %v1033
      %1961 = vmatmul.mubr.f32.gmra.mxu0 %v1032
      %v1962 = vpop.f32.mrf.mxu0
      %v1963 = vadd.f32 %v1873, %v1962
      %v1964 = vpop.f32.mrf.mxu0
      %1965 = vmatprep.mubr.f32.mxu0 %v1049
      %1966 = vmatmul.mubr.f32.gmra.mxu0 %v1048
      %v1967 = vpop.f32.mrf.mxu0
      %v1968 = vadd.f32 %v1878, %v1967
      %v1969 = vpop.f32.mrf.mxu0
      %1970 = vmatprep.mubr.f32.mxu0 %v1065
      %1971 = vmatmul.mubr.f32.gmra.mxu0 %v1064
      %v1972 = vpop.f32.mrf.mxu0
      %v1973 = vadd.f32 %v1883, %v1972
      %v1974 = vpop.f32.mrf.mxu0
      %1975 = vmatprep.mubr.f32.mxu0 %v1081
      %1976 = vmatmul.mubr.f32.gmra.mxu0 %v1080
      %v1977 = vpop.f32.mrf.mxu0
      %v1978 = vadd.f32 %v1888, %v1977
      %v1979 = vpop.f32.mrf.mxu0
      %1980 = vmatprep.mubr.f32.mxu0 %v1097
      %1981 = vmatmul.mubr.f32.gmra.mxu0 %v1096
      %v1982 = vpop.f32.mrf.mxu0
      %v1983 = vadd.f32 %v1893, %v1982
      %v1984 = vpop.f32.mrf.mxu0
      %1985 = vdwg.mxu0
      %1986 = vmatprep.subr.mxu0 0.0
      %1987 = vmatpush1.msra.mxu0 %v1339
      %1988 = vmatprep.subr.mxu0 0.0
      %1989 = vmatpush1.msra.mxu0 %v1338
      %1990 = vmatprep.subr.mxu0 0.0
      %1991 = vmatpush1.msra.mxu0 %v1337
      %1992 = vmatprep.subr.mxu0 0.0
      %1993 = vmatpush1.msra.mxu0 %v1336
      %1994 = vmatprep.subr.mxu0 0.0
      %1995 = vmatpush1.msra.mxu0 %v1335
      %1996 = vmatprep.subr.mxu0 0.0
      %1997 = vmatpush1.msra.mxu0 %v1334
      %1998 = vmatprep.subr.mxu0 0.0
      %1999 = vmatpush1.msra.mxu0 %v1333
      %2000 = vmatprep.subr.mxu0 0.0
      %2001 = vmatpush1.msra.mxu0 %v1332
      %2002 = vmatprep.subr.mxu0 0.0
      %2003 = vmatpush1.msra.mxu0 %v1331
      %2004 = vmatprep.subr.mxu0 0.0
      %2005 = vmatpush1.msra.mxu0 %v1330
      %2006 = vmatprep.subr.mxu0 0.0
      %2007 = vmatpush1.msra.mxu0 %v1329
      %2008 = vmatprep.subr.mxu0 0.0
      %2009 = vmatpush1.msra.mxu0 %v1328
      %2010 = vmatprep.subr.mxu0 0.0
      %2011 = vmatpush1.msra.mxu0 %v1327
      %2012 = vmatprep.subr.mxu0 0.0
      %2013 = vmatpush1.msra.mxu0 %v1326
      %2014 = vmatprep.subr.mxu0 0.0
      %2015 = vmatpush1.msra.mxu0 %v1325
      %2016 = vmatprep.subr.mxu0 0.0
      %2017 = vmatpush1.msra.mxu0 %v1324
      %2018 = vmatprep.subr.mxu0 0.0
      %2019 = vmatpush2.msra.mxu0 %v1355
      %2020 = vmatprep.subr.mxu0 0.0
      %2021 = vmatpush2.msra.mxu0 %v1354
      %2022 = vmatprep.subr.mxu0 0.0
      %2023 = vmatpush2.msra.mxu0 %v1353
      %2024 = vmatprep.subr.mxu0 0.0
      %2025 = vmatpush2.msra.mxu0 %v1352
      %2026 = vmatprep.subr.mxu0 0.0
      %2027 = vmatpush2.msra.mxu0 %v1351
      %2028 = vmatprep.subr.mxu0 0.0
      %2029 = vmatpush2.msra.mxu0 %v1350
      %2030 = vmatprep.subr.mxu0 0.0
      %2031 = vmatpush2.msra.mxu0 %v1349
      %2032 = vmatprep.subr.mxu0 0.0
      %2033 = vmatpush2.msra.mxu0 %v1348
      %2034 = vmatprep.subr.mxu0 0.0
      %2035 = vmatpush2.msra.mxu0 %v1347
      %2036 = vmatprep.subr.mxu0 0.0
      %2037 = vmatpush2.msra.mxu0 %v1346
      %2038 = vmatprep.subr.mxu0 0.0
      %2039 = vmatpush2.msra.mxu0 %v1345
      %2040 = vmatprep.subr.mxu0 0.0
      %2041 = vmatpush2.msra.mxu0 %v1344
      %2042 = vmatprep.subr.mxu0 0.0
      %2043 = vmatpush2.msra.mxu0 %v1343
      %2044 = vmatprep.subr.mxu0 0.0
      %2045 = vmatpush2.msra.mxu0 %v1342
      %2046 = vmatprep.subr.mxu0 0.0
      %2047 = vmatpush2.msra.mxu0 %v1341
      %2048 = vmatprep.subr.mxu0 0.0
      %2049 = vmatpush2.msra.mxu0 %v1340
      %2050 = vmatprep.mubr.f32.mxu0 %v1035
      %2051 = vmatmul.mubr.f32.gmra.mxu0 %v1034
      %v2052 = vpop.f32.mrf.mxu0
      %v2053 = vadd.f32 %v1963, %v2052
      %v2054 = vpop.f32.mrf.mxu0
      %2055 = vmatprep.mubr.f32.mxu0 %v1051
      %2056 = vmatmul.mubr.f32.gmra.mxu0 %v1050
      %v2057 = vpop.f32.mrf.mxu0
      %v2058 = vadd.f32 %v1968, %v2057
      %v2059 = vpop.f32.mrf.mxu0
      %2060 = vmatprep.mubr.f32.mxu0 %v1067
      %2061 = vmatmul.mubr.f32.gmra.mxu0 %v1066
      %v2062 = vpop.f32.mrf.mxu0
      %v2063 = vadd.f32 %v1973, %v2062
      %v2064 = vpop.f32.mrf.mxu0
      %2065 = vmatprep.mubr.f32.mxu0 %v1083
      %2066 = vmatmul.mubr.f32.gmra.mxu0 %v1082
      %v2067 = vpop.f32.mrf.mxu0
      %v2068 = vadd.f32 %v1978, %v2067
      %v2069 = vpop.f32.mrf.mxu0
      %2070 = vmatprep.mubr.f32.mxu0 %v1099
      %2071 = vmatmul.mubr.f32.gmra.mxu0 %v1098
      %v2072 = vpop.f32.mrf.mxu0
      %v2073 = vadd.f32 %v1983, %v2072
      %v2074 = vpop.f32.mrf.mxu0
      %2075 = vdwg.mxu0
      %v2076 = vsel %vm195, %v2053, 0.0
      %2077 = vadd.xlane.f32.xlu0 %v2076
      %v2078 = vpop.xlane.xlu0 %2077
      %v2079 = vsel %vm195, %v2058, 0.0
      %2080 = vadd.xlane.f32.xlu0 %v2079
      %v2081 = vpop.xlane.xlu0 %2080
      %v2082 = vsel %vm195, %v2063, 0.0
      %2083 = vadd.xlane.f32.xlu0 %v2082
      %v2084 = vpop.xlane.xlu0 %2083
      %v2085 = vsel %vm195, %v2068, 0.0
      %2086 = vadd.xlane.f32.xlu0 %v2085
      %v2087 = vpop.xlane.xlu0 %2086
      %v2088 = vsel %vm195, %v2073, 0.0
      %2089 = vadd.xlane.f32.xlu0 %v2088
      %v2090 = vpop.xlane.xlu0 %2089
      %v2091 = vrcp.pop 7.0
      %v2092 = vmul.f32 %v2078, %v2091
      %v2093 = vmul.f32 %v2081, %v2091
      %v2094 = vmul.f32 %v2084, %v2091
      %v2095 = vmul.f32 %v2087, %v2091
      %v2096 = vmul.f32 %v2090, %v2091
      %v2097 = vsub.f32 %v2053, %v2092
      %v2098 = vsub.f32 %v2058, %v2093
      %v2099 = vsub.f32 %v2063, %v2094
      %v2100 = vsub.f32 %v2068, %v2095
      %v2101 = vsub.f32 %v2073, %v2096
      %v2102 = vmul.f32 %v2097, %v2097
      %v2103 = vmul.f32 %v2098, %v2098
      %v2104 = vmul.f32 %v2099, %v2099
      %v2105 = vmul.f32 %v2100, %v2100
      %v2106 = vmul.f32 %v2101, %v2101
      %v2107 = vsel %vm195, %v2102, 0.0
      %2108 = vadd.xlane.f32.xlu0 %v2107
      %v2109 = vpop.xlane.xlu0 %2108
      %v2110 = vsel %vm195, %v2103, 0.0
      %2111 = vadd.xlane.f32.xlu0 %v2110
      %v2112 = vpop.xlane.xlu0 %2111
      %v2113 = vsel %vm195, %v2104, 0.0
      %2114 = vadd.xlane.f32.xlu0 %v2113
      %v2115 = vpop.xlane.xlu0 %2114
      %v2116 = vsel %vm195, %v2105, 0.0
      %2117 = vadd.xlane.f32.xlu0 %v2116
      %v2118 = vpop.xlane.xlu0 %2117
      %v2119 = vsel %vm195, %v2106, 0.0
      %2120 = vadd.xlane.f32.xlu0 %v2119
      %v2121 = vpop.xlane.xlu0 %2120
      %v2122 = vmul.f32 %v2109, %v2091
      %v2123 = vmul.f32 %v2112, %v2091
      %v2124 = vmul.f32 %v2115, %v2091
      %v2125 = vmul.f32 %v2118, %v2091
      %v2126 = vmul.f32 %v2121, %v2091
      %v2127 = vadd.f32 %v2122, 1e-05
      %v2128 = vadd.f32 %v2123, 1e-05
      %v2129 = vadd.f32 %v2124, 1e-05
      %v2130 = vadd.f32 %v2125, 1e-05
      %v2131 = vadd.f32 %v2126, 1e-05
      %v2132 = vrsqrt.pop %v2127
      %v2133 = vrsqrt.pop %v2128
      %v2134 = vrsqrt.pop %v2129
      %v2135 = vrsqrt.pop %v2130
      %v2136 = vrsqrt.pop %v2131
      %v2137 = vmul.f32 %v2097, %v2132
      %v2138 = vmul.f32 %v2098, %v2133
      %v2139 = vmul.f32 %v2099, %v2134
      %v2140 = vmul.f32 %v2100, %v2135
      %v2141 = vmul.f32 %v2101, %v2136
      %2142 = vst.msk [vmem:[%s172] sm:$0xff] %vm195, %v2137
      %2143 = vst.msk [vmem:[%s172 + $0x8] sm:$0xff] %vm195, %v2138
      %2144 = vst.msk [vmem:[%s172 + $0x10] sm:$0xff] %vm195, %v2139
      %2145 = vst.msk [vmem:[%s172 + $0x18] sm:$0xff] %vm195, %v2140
      %2146 = vst.msk [vmem:[%s172 + $0x20] sm:$0xff] %vm195, %v2141
      %s2147 = smul.u32 5, %s14
      %p2148 = scmp.lt.s32.totalorder %s2147, 9
      %s2149 = scalar_select %p2148, %s2147, 9
      %s2150 = smul.addr %s2149, 8
      %s2151 = scalar_lea.vmem %s3, %s2150
      // Predicated region
      $region33: #{tpu_custom_call.1} parent=31 // pred_check
        %p2152 = pneg %p100
      $region34: #{tpu_custom_call.1} parent=31 // pred_check_branch
        %2154 = sbr.rel (%p2152) target = $region36
      $region35: #{tpu_custom_call.1} parent=31 // pred_region
        %s2155 = smul.u32 5, %s14
      $region36: #{tpu_custom_call.1} parent=31 // pred_fallthru
        _
    $region32: #{tpu_custom_call.1} parent=5 // pred_fallthru
      _
    %p2156 = scmp.le.s32.totalorder 2, %s9
    // Predicated region
    $region37: #{tpu_custom_call.1} parent=5 // pred_check
      %p2157 = pneg %p2156
    $region38: #{tpu_custom_call.1} parent=5 // pred_check_branch
      %2159 = sbr.rel (%p2157) target = $region40
    $region39: #{tpu_custom_call.1} parent=5 // pred_region
      %s2160 = ssub.s32 %s9, 2
      // Predicated region
      $region41: #{tpu_custom_call.1} parent=39 // pred_check
        %p2161 = pneg %p106
      $region42: #{tpu_custom_call.1} parent=39 // pred_check_branch
        %2163 = sbr.rel (%p2161) target = $region44
      $region43: #{tpu_custom_call.1} parent=39 // pred_region
        %s2164 = smul.u32 5, %s15
        %p2165 = scmp.lt.s32.totalorder %s2164, 9
        %s2166 = scalar_select %p2165, %s2164, 9
        %s2167 = smul.addr %s2166, 8
        %s2168 = scalar_lea.vmem %s3, %s2167
      $region44: #{tpu_custom_call.1} parent=39 // pred_fallthru
        _
    $region40: #{tpu_custom_call.1} parent=5 // pred_fallthru
      _
  $region6: #{tpu_custom_call.1} parent=0 // loop_footer
    %s13 = sadd.s32 1, %s9
  $region7: #{tpu_custom_call.1} parent=0 // loop_footer_branch
    %8 = sbr.rel target = $region3
  $region8: #{tpu_custom_call.1} parent=0 // loop_exit
    _

</llo_original>
